<compile_context>
chip_gen: v5e
topology: v5e:2x2
jax: 0.10.0
libtpu: 0.0.40
codegen_flags: <defaults>
</compile_context>

<pallas_src>
import functools

import jax
import jax.numpy as jnp
from jax.experimental import pallas as pl
from jax.experimental.pallas import tpu as pltpu


SUB = 128    # group-id granularity: one 128-lane sub-block
TILE = 512   # lanes processed per grid step (multiple of SUB)


# ----------------------------- Pallas kernel --------------------------------
def _compose_lighting_kernel(gid_ref, d_ref, mus_ref, lam_ref, ampt_ref, o_ref,
                             *, sub_blocks, sub):
    """One TILE of the fused ComposeLighting forward.

    gid_ref  : (num_sub_blocks_total,) int32 SMEM   group id per 128-lane block
    d_ref    : (3, TILE) f32                        directions, lane-dense
    mus_ref  : (G, K, 3) f32                        lambda-scaled lobe axes
    lam_ref  : (G, K, 1) f32                        lobe sharpness (bias term)
    ampt_ref : (G, 3, K) f32                        lobe RGB amplitudes (T)
    o_ref    : (3, TILE) f32                        radiance, lane-dense
    """
    i = pl.program_id(0)
    for b in range(sub_blocks):                       # static unroll, B = TILE/SUB
        g = gid_ref[i * sub_blocks + b]               # dynamic scalar from SMEM
        mus_g = mus_ref[g]                            # (K, 3)
        lam_g = lam_ref[g]                            # (K, 1)
        amp_g = ampt_ref[g]                           # (3, K)
        d_b = d_ref[:, b * sub:(b + 1) * sub]         # (3, SUB), static slice

        # z[k, t] = (lam_k * mu_k) . d_t    -- 3-wide contraction on the MXU
        z = jnp.dot(mus_g, d_b,
                    preferred_element_type=jnp.float32,
                    precision=jax.lax.Precision.HIGHEST)        # (K, SUB)

        # SG basis weights: exp(lam*(cos-1)) == exp((lam*mu).d - lam)  (EUP)
        w = jnp.exp(z - lam_g)                                   # (K, SUB)

        # out[c, t] = sum_k amp[c, k] * w[k, t]  -- K-wide contraction on MXU
        out_b = jnp.dot(amp_g, w,
                        preferred_element_type=jnp.float32,
                        precision=jax.lax.Precision.HIGHEST)     # (3, SUB)

        o_ref[:, b * sub:(b + 1) * sub] = out_b


def _compose_lighting_call(gid, d_t, mus, lams, ampt, *, tile, sub):
    """Fused compose forward on a lane-dense (3, N_pad) direction slab."""
    n_pad = d_t.shape[1]
    num_tiles = n_pad // tile
    sub_blocks = tile // sub
    ng, k, _ = mus.shape

    kernel = functools.partial(_compose_lighting_kernel,
                               sub_blocks=sub_blocks, sub=sub)

    cost = pl.CostEstimate(
        flops=12 * k * n_pad,          # two 2*3*K contractions per sample
        transcendentals=k * n_pad,     # one exp per lobe per sample
        bytes_accessed=24 * n_pad,     # 12 B in + 12 B out per sample
    )

    return pl.pallas_call(
        kernel,
        out_shape=jax.ShapeDtypeStruct((3, n_pad), jnp.float32),
        grid_spec=pltpu.PrefetchScalarGridSpec(
            num_scalar_prefetch=1,
            grid=(num_tiles,),
            in_specs=[
                pl.BlockSpec((3, tile), lambda i, gid_ref: (0, i)),
                # Full stacked params resident in VMEM (constant index_map):
                pl.BlockSpec((ng, k, 3), lambda i, gid_ref: (0, 0, 0)),
                pl.BlockSpec((ng, k, 1), lambda i, gid_ref: (0, 0, 0)),
                pl.BlockSpec((ng, 3, k), lambda i, gid_ref: (0, 0, 0)),
            ],
            out_specs=pl.BlockSpec((3, tile), lambda i, gid_ref: (0, i)),
        ),
        compiler_params=pltpu.CompilerParams(
            dimension_semantics=("parallel",)),
        cost_estimate=cost,
    )(gid, d_t, mus, lams, ampt)


@functools.partial(jax.jit, static_argnames=("spans", "n_pad", "tile", "sub"))
def _compose_forward(direction, gid, mus, lams, ampt, *, spans, n_pad, tile, sub):
    """One transpose in, static scatter into a padded slab, kernel, one
    transpose out — minimal wrapper HBM traffic."""
    d_t = direction.astype(jnp.float32).T                  # (3, N)
    slab = jnp.zeros((3, n_pad), jnp.float32)
    for (off, pad_off, cnt) in spans:                      # static offsets
        chunk = jax.lax.slice_in_dim(d_t, off, off + cnt, axis=1)
        slab = jax.lax.dynamic_update_slice_in_dim(slab, chunk, pad_off, axis=1)

    out_t = _compose_lighting_call(gid, slab, mus, lams, ampt,
                                   tile=tile, sub=sub)     # (3, N_pad)

    outs = [jax.lax.slice_in_dim(out_t, pad_off, pad_off + cnt, axis=1)
            for (_, pad_off, cnt) in spans]
    return jnp.concatenate(outs, axis=1).T                 # (N, 3)


# ------------------------- ComposeLighting (JAX side) -----------------------
class SGLighting:
    """Synthetic sub-lighting: spherical-Gaussian environment light."""

    def __init__(self, spp, num_lobes, seed):
        self.spp = spp
        self.num_lobes = num_lobes
        key = jax.random.PRNGKey(seed)
        k_mu, k_lam, k_amp = jax.random.split(key, 3)
        mu = jax.random.normal(k_mu, (num_lobes, 3), dtype=jnp.float32)
        self.mu = mu / jnp.linalg.norm(mu, axis=-1, keepdims=True)
        self.lam = jax.nn.softplus(
            jax.random.normal(k_lam, (1, num_lobes), dtype=jnp.float32)) + 1.0
        self.amp = jax.nn.softplus(
            jax.random.normal(k_amp, (num_lobes, 3), dtype=jnp.float32))

    def reference(self, direction):
        """Pure-JAX reference (no Pallas), exact f32 math."""
        cos = jnp.dot(direction, self.mu.T,
                      precision=jax.lax.Precision.HIGHEST)
        w = jnp.exp(self.lam * (cos - 1.0))
        return jnp.dot(w, self.amp, precision=jax.lax.Precision.HIGHEST)


class ComposeLighting:
    """JAX equivalent of the PyTorch ComposeLighting forward pass."""

    TILE = TILE   # lanes per grid step
    SUB = SUB     # group-id granularity (per-group padding unit)

    def __init__(self, lightings):
        self.lightings = dict(lightings)
        vals = self.lighting_values
        ks = {l.num_lobes for l in vals}
        assert len(ks) == 1, "fused kernel stacks params; lobe counts must match"

        # Stack per-sub-lighting params, folding lambda into the lobe axes.
        # The -lam bias is kept separate (applied in-kernel) so sharp lobes
        # cannot overflow exp in f32.
        self._mus = jnp.stack([l.lam.T * l.mu for l in vals])   # (G, K, 3)
        self._lams = jnp.stack([l.lam.T for l in vals])         # (G, K, 1)
        self._ampt = jnp.stack([l.amp.T for l in vals])         # (G, 3, K)

        # Static tiling bookkeeping — depends only on sub_spps and TILE/SUB,
        # so it is hoisted out of forward() (no per-call host work / H2D).
        sub, tile = self.SUB, self.TILE
        gids, spans = [], []
        off, pad_off = 0, 0
        for g, n in enumerate(self.sub_spps):
            n_pad = -(-n // sub) * sub
            gids.extend([g] * (n_pad // sub))
            spans.append((off, pad_off, n))      # (src offset, slab offset, count)
            off += n
            pad_off += n_pad
        n_total = -(-pad_off // tile) * tile
        gids.extend([0] * ((n_total - pad_off) // sub))  # tail pad (sliced off)
        self._gid = jnp.asarray(gids, dtype=jnp.int32)   # one transfer, at init
        self._spans = tuple(spans)
        self._n_pad = n_total

    @property
    def lighting_values(self):
        return list(self.lightings.values())

    @property
    def sub_spps(self):
        return [l.spp for l in self.lighting_values]

    @property
    def spp(self):
        return sum(self.sub_spps)

    def forward(self, direction):
        """direction: (N, 3) with N == sum(sub_spps) -> (N, 3) radiance."""
        assert direction.shape == (self.spp, 3), direction.shape
        return _compose_forward(direction, self._gid, self._mus, self._lams,
                                self._ampt, spans=self._spans,
                                n_pad=self._n_pad, tile=self.TILE, sub=self.SUB)

    def reference(self, direction):
        outs, offset = [], 0
        for lighting, n in zip(self.lighting_values, self.sub_spps):
            outs.append(lighting.reference(direction[offset:offset + n]))
            offset += n
        return jnp.concatenate(outs, axis=0)


# ---------------------------------- main -------------------------------------
if __name__ == "__main__":
    # Two sub-lightings; spps chosen small, one non-multiple of the 128-lane
    # sub-block to exercise the padding path.  direction is (576, 3).
    compose = ComposeLighting({
        "env_a": SGLighting(spp=256, num_lobes=16, seed=1),
        "env_b": SGLighting(spp=320, num_lobes=16, seed=2),
    })

    key = jax.random.PRNGKey(0)
    direction = jax.random.normal(key, (compose.spp, 3), dtype=jnp.float32)
    direction = direction / jnp.linalg.norm(direction, axis=-1, keepdims=True)

    out = compose.forward(direction)
    out = jax.block_until_ready(out)

    ref = compose.reference(direction)
    assert out.shape == (compose.spp, 3), out.shape
    assert jnp.allclose(out, ref, atol=1e-4, rtol=1e-4), (
        float(jnp.max(jnp.abs(out - ref))))

    print("KERNEL_OK")
</pallas_src>

<mosaic_0001>
module attributes {stable_mosaic.version = 11 : i64} {
  func.func @_compose_lighting_kernel(%arg0: i32, %arg1: memref<8xi32, #tpu.memory_space<smem>>, %arg2: memref<3x512xf32, #tpu.memory_space<vmem>>, %arg3: memref<2x16x3xf32, #tpu.memory_space<vmem>>, %arg4: memref<2x16x1xf32, #tpu.memory_space<vmem>>, %arg5: memref<2x3x16xf32, #tpu.memory_space<vmem>>, %arg6: memref<3x512xf32, #tpu.memory_space<vmem>>) attributes {dimension_semantics = [#tpu.dimension_semantics<parallel>], iteration_bounds = array<i64: 2>, scalar_prefetch = 1 : i64, scratch_operands = 0 : i64, tpu.core_type = #tpu.core_type<tc>, window_params = [{transform_indices = @transform_0, window_bounds = array<i64: 3, 512>}, {pipeline_mode = #tpu.pipeline_mode<synchronous>, transform_indices = @transform_1, window_bounds = array<i64: 2, 16, 3>}, {pipeline_mode = #tpu.pipeline_mode<synchronous>, transform_indices = @transform_2, window_bounds = array<i64: 2, 16, 1>}, {pipeline_mode = #tpu.pipeline_mode<synchronous>, transform_indices = @transform_3, window_bounds = array<i64: 2, 3, 16>}, {transform_indices = @transform_4, window_bounds = array<i64: 3, 512>}]} {
    %c4_i32 = arith.constant 4 : i32
    %0 = arith.muli %arg0, %c4_i32 : i32
    %c0_i32 = arith.constant 0 : i32
    %1 = arith.addi %0, %c0_i32 : i32
    %2 = arith.index_cast %1 : i32 to index
    %3 = memref.load %arg1[%2] : memref<8xi32, #tpu.memory_space<smem>>
    %4 = arith.index_cast %3 : i32 to index
    %c0 = arith.constant 0 : index
    %c0_0 = arith.constant 0 : index
    %5 = vector.load %arg3[%4, %c0, %c0_0] : memref<2x16x3xf32, #tpu.memory_space<vmem>>, vector<1x16x3xf32>
    %6 = vector.shape_cast %5 : vector<1x16x3xf32> to vector<16x3xf32>
    %7 = arith.index_cast %3 : i32 to index
    %c0_1 = arith.constant 0 : index
    %c0_2 = arith.constant 0 : index
    %8 = vector.load %arg4[%7, %c0_1, %c0_2] : memref<2x16x1xf32, #tpu.memory_space<vmem>>, vector<1x16x1xf32>
    %9 = vector.shape_cast %8 : vector<1x16x1xf32> to vector<16x1xf32>
    %10 = arith.index_cast %3 : i32 to index
    %c0_3 = arith.constant 0 : index
    %c0_4 = arith.constant 0 : index
    %11 = vector.load %arg5[%10, %c0_3, %c0_4] : memref<2x3x16xf32, #tpu.memory_space<vmem>>, vector<1x3x16xf32>
    %12 = vector.shape_cast %11 : vector<1x3x16xf32> to vector<3x16xf32>
    %c0_5 = arith.constant 0 : index
    %c0_6 = arith.constant 0 : index
    %13 = vector.load %arg2[%c0_5, %c0_6] : memref<3x512xf32, #tpu.memory_space<vmem>>, vector<3x128xf32>
    %cst = arith.constant dense<0.000000e+00> : vector<16x128xf32>
    %14 = tpu.matmul %6, %13, %cst {dimension_numbers = #tpu.dot_dimension_numbers<[1], [0], [0], [1], [0, 0, 1, 1], [], []>, precision = #tpu.contract_precision<fp32>} : vector<16x3xf32>, vector<3x128xf32>, vector<16x128xf32> -> vector<16x128xf32>
    %15 = vector.broadcast %9 : vector<16x1xf32> to vector<16x128xf32>
    %16 = arith.subf %14, %15 : vector<16x128xf32>
    %17 = math.exp %16 : vector<16x128xf32>
    %cst_7 = arith.constant dense<0.000000e+00> : vector<3x128xf32>
    %18 = tpu.matmul %12, %17, %cst_7 {dimension_numbers = #tpu.dot_dimension_numbers<[1], [0], [0], [1], [0, 0, 1, 1], [], []>, precision = #tpu.contract_precision<fp32>} : vector<3x16xf32>, vector<16x128xf32>, vector<3x128xf32> -> vector<3x128xf32>
    %c0_8 = arith.constant 0 : index
    %c0_9 = arith.constant 0 : index
    %19 = vector.load %arg6[%c0_8, %c0_9] : memref<3x512xf32, #tpu.memory_space<vmem>>, vector<3x128xf32>
    tpu.vector_store %arg6[%c0_8, %c0_9], %18 {strides = array<i32>} : memref<3x512xf32, #tpu.memory_space<vmem>>, vector<3x128xf32>,
    %c4_i32_10 = arith.constant 4 : i32
    %20 = arith.muli %arg0, %c4_i32_10 : i32
    %c1_i32 = arith.constant 1 : i32
    %21 = arith.addi %20, %c1_i32 : i32
    %22 = arith.index_cast %21 : i32 to index
    %23 = memref.load %arg1[%22] : memref<8xi32, #tpu.memory_space<smem>>
    %24 = arith.index_cast %23 : i32 to index
    %c0_11 = arith.constant 0 : index
    %c0_12 = arith.constant 0 : index
    %25 = vector.load %arg3[%24, %c0_11, %c0_12] : memref<2x16x3xf32, #tpu.memory_space<vmem>>, vector<1x16x3xf32>
    %26 = vector.shape_cast %25 : vector<1x16x3xf32> to vector<16x3xf32>
    %27 = arith.index_cast %23 : i32 to index
    %c0_13 = arith.constant 0 : index
    %c0_14 = arith.constant 0 : index
    %28 = vector.load %arg4[%27, %c0_13, %c0_14] : memref<2x16x1xf32, #tpu.memory_space<vmem>>, vector<1x16x1xf32>
    %29 = vector.shape_cast %28 : vector<1x16x1xf32> to vector<16x1xf32>
    %30 = arith.index_cast %23 : i32 to index
    %c0_15 = arith.constant 0 : index
    %c0_16 = arith.constant 0 : index
    %31 = vector.load %arg5[%30, %c0_15, %c0_16] : memref<2x3x16xf32, #tpu.memory_space<vmem>>, vector<1x3x16xf32>
    %32 = vector.shape_cast %31 : vector<1x3x16xf32> to vector<3x16xf32>
    %c0_17 = arith.constant 0 : index
    %c128 = arith.constant 128 : index
    %33 = vector.load %arg2[%c0_17, %c128] : memref<3x512xf32, #tpu.memory_space<vmem>>, vector<3x128xf32>
    %cst_18 = arith.constant dense<0.000000e+00> : vector<16x128xf32>
    %34 = tpu.matmul %26, %33, %cst_18 {dimension_numbers = #tpu.dot_dimension_numbers<[1], [0], [0], [1], [0, 0, 1, 1], [], []>, precision = #tpu.contract_precision<fp32>} : vector<16x3xf32>, vector<3x128xf32>, vector<16x128xf32> -> vector<16x128xf32>
    %35 = vector.broadcast %29 : vector<16x1xf32> to vector<16x128xf32>
    %36 = arith.subf %34, %35 : vector<16x128xf32>
    %37 = math.exp %36 : vector<16x128xf32>
    %cst_19 = arith.constant dense<0.000000e+00> : vector<3x128xf32>
    %38 = tpu.matmul %32, %37, %cst_19 {dimension_numbers = #tpu.dot_dimension_numbers<[1], [0], [0], [1], [0, 0, 1, 1], [], []>, precision = #tpu.contract_precision<fp32>} : vector<3x16xf32>, vector<16x128xf32>, vector<3x128xf32> -> vector<3x128xf32>
    %c0_20 = arith.constant 0 : index
    %c128_21 = arith.constant 128 : index
    %39 = vector.load %arg6[%c0_20, %c128_21] : memref<3x512xf32, #tpu.memory_space<vmem>>, vector<3x128xf32>
    tpu.vector_store %arg6[%c0_20, %c128_21], %38 {strides = array<i32>} : memref<3x512xf32, #tpu.memory_space<vmem>>, vector<3x128xf32>,
    %c4_i32_22 = arith.constant 4 : i32
    %40 = arith.muli %arg0, %c4_i32_22 : i32
    %c2_i32 = arith.constant 2 : i32
    %41 = arith.addi %40, %c2_i32 : i32
    %42 = arith.index_cast %41 : i32 to index
    %43 = memref.load %arg1[%42] : memref<8xi32, #tpu.memory_space<smem>>
    %44 = arith.index_cast %43 : i32 to index
    %c0_23 = arith.constant 0 : index
    %c0_24 = arith.constant 0 : index
    %45 = vector.load %arg3[%44, %c0_23, %c0_24] : memref<2x16x3xf32, #tpu.memory_space<vmem>>, vector<1x16x3xf32>
    %46 = vector.shape_cast %45 : vector<1x16x3xf32> to vector<16x3xf32>
    %47 = arith.index_cast %43 : i32 to index
    %c0_25 = arith.constant 0 : index
    %c0_26 = arith.constant 0 : index
    %48 = vector.load %arg4[%47, %c0_25, %c0_26] : memref<2x16x1xf32, #tpu.memory_space<vmem>>, vector<1x16x1xf32>
    %49 = vector.shape_cast %48 : vector<1x16x1xf32> to vector<16x1xf32>
    %50 = arith.index_cast %43 : i32 to index
    %c0_27 = arith.constant 0 : index
    %c0_28 = arith.constant 0 : index
    %51 = vector.load %arg5[%50, %c0_27, %c0_28] : memref<2x3x16xf32, #tpu.memory_space<vmem>>, vector<1x3x16xf32>
    %52 = vector.shape_cast %51 : vector<1x3x16xf32> to vector<3x16xf32>
    %c0_29 = arith.constant 0 : index
    %c256 = arith.constant 256 : index
    %53 = vector.load %arg2[%c0_29, %c256] : memref<3x512xf32, #tpu.memory_space<vmem>>, vector<3x128xf32>
    %cst_30 = arith.constant dense<0.000000e+00> : vector<16x128xf32>
    %54 = tpu.matmul %46, %53, %cst_30 {dimension_numbers = #tpu.dot_dimension_numbers<[1], [0], [0], [1], [0, 0, 1, 1], [], []>, precision = #tpu.contract_precision<fp32>} : vector<16x3xf32>, vector<3x128xf32>, vector<16x128xf32> -> vector<16x128xf32>
    %55 = vector.broadcast %49 : vector<16x1xf32> to vector<16x128xf32>
    %56 = arith.subf %54, %55 : vector<16x128xf32>
    %57 = math.exp %56 : vector<16x128xf32>
    %cst_31 = arith.constant dense<0.000000e+00> : vector<3x128xf32>
    %58 = tpu.matmul %52, %57, %cst_31 {dimension_numbers = #tpu.dot_dimension_numbers<[1], [0], [0], [1], [0, 0, 1, 1], [], []>, precision = #tpu.contract_precision<fp32>} : vector<3x16xf32>, vector<16x128xf32>, vector<3x128xf32> -> vector<3x128xf32>
    %c0_32 = arith.constant 0 : index
    %c256_33 = arith.constant 256 : index
    %59 = vector.load %arg6[%c0_32, %c256_33] : memref<3x512xf32, #tpu.memory_space<vmem>>, vector<3x128xf32>
    tpu.vector_store %arg6[%c0_32, %c256_33], %58 {strides = array<i32>} : memref<3x512xf32, #tpu.memory_space<vmem>>, vector<3x128xf32>,
    %c4_i32_34 = arith.constant 4 : i32
    %60 = arith.muli %arg0, %c4_i32_34 : i32
    %c3_i32 = arith.constant 3 : i32
    %61 = arith.addi %60, %c3_i32 : i32
    %62 = arith.index_cast %61 : i32 to index
    %63 = memref.load %arg1[%62] : memref<8xi32, #tpu.memory_space<smem>>
    %64 = arith.index_cast %63 : i32 to index
    %c0_35 = arith.constant 0 : index
    %c0_36 = arith.constant 0 : index
    %65 = vector.load %arg3[%64, %c0_35, %c0_36] : memref<2x16x3xf32, #tpu.memory_space<vmem>>, vector<1x16x3xf32>
    %66 = vector.shape_cast %65 : vector<1x16x3xf32> to vector<16x3xf32>
    %67 = arith.index_cast %63 : i32 to index
    %c0_37 = arith.constant 0 : index
    %c0_38 = arith.constant 0 : index
    %68 = vector.load %arg4[%67, %c0_37, %c0_38] : memref<2x16x1xf32, #tpu.memory_space<vmem>>, vector<1x16x1xf32>
    %69 = vector.shape_cast %68 : vector<1x16x1xf32> to vector<16x1xf32>
    %70 = arith.index_cast %63 : i32 to index
    %c0_39 = arith.constant 0 : index
    %c0_40 = arith.constant 0 : index
    %71 = vector.load %arg5[%70, %c0_39, %c0_40] : memref<2x3x16xf32, #tpu.memory_space<vmem>>, vector<1x3x16xf32>
    %72 = vector.shape_cast %71 : vector<1x3x16xf32> to vector<3x16xf32>
    %c0_41 = arith.constant 0 : index
    %c384 = arith.constant 384 : index
    %73 = vector.load %arg2[%c0_41, %c384] : memref<3x512xf32, #tpu.memory_space<vmem>>, vector<3x128xf32>
    %cst_42 = arith.constant dense<0.000000e+00> : vector<16x128xf32>
    %74 = tpu.matmul %66, %73, %cst_42 {dimension_numbers = #tpu.dot_dimension_numbers<[1], [0], [0], [1], [0, 0, 1, 1], [], []>, precision = #tpu.contract_precision<fp32>} : vector<16x3xf32>, vector<3x128xf32>, vector<16x128xf32> -> vector<16x128xf32>
    %75 = vector.broadcast %69 : vector<16x1xf32> to vector<16x128xf32>
    %76 = arith.subf %74, %75 : vector<16x128xf32>
    %77 = math.exp %76 : vector<16x128xf32>
    %cst_43 = arith.constant dense<0.000000e+00> : vector<3x128xf32>
    %78 = tpu.matmul %72, %77, %cst_43 {dimension_numbers = #tpu.dot_dimension_numbers<[1], [0], [0], [1], [0, 0, 1, 1], [], []>, precision = #tpu.contract_precision<fp32>} : vector<3x16xf32>, vector<16x128xf32>, vector<3x128xf32> -> vector<3x128xf32>
    %c0_44 = arith.constant 0 : index
    %c384_45 = arith.constant 384 : index
    %79 = vector.load %arg6[%c0_44, %c384_45] : memref<3x512xf32, #tpu.memory_space<vmem>>, vector<3x128xf32>
    tpu.vector_store %arg6[%c0_44, %c384_45], %78 {strides = array<i32>} : memref<3x512xf32, #tpu.memory_space<vmem>>, vector<3x128xf32>,
    return
  }
  func.func @transform_0(%arg0: i32, %arg1: memref<8xi32, #tpu.memory_space<smem>>) -> (i32, i32) {
    %c0_i32 = arith.constant 0 : i32
    %c0_i32_0 = arith.constant 0 : i32
    return %c0_i32, %arg0 : i32, i32
  }
  func.func @transform_1(%arg0: i32, %arg1: memref<8xi32, #tpu.memory_space<smem>>) -> (i32, i32, i32) {
    %c0_i32 = arith.constant 0 : i32
    %c0_i32_0 = arith.constant 0 : i32
    %c0_i32_1 = arith.constant 0 : i32
    %c0_i32_2 = arith.constant 0 : i32
    return %c0_i32, %c0_i32_0, %c0_i32_1 : i32, i32, i32
  }
  func.func @transform_2(%arg0: i32, %arg1: memref<8xi32, #tpu.memory_space<smem>>) -> (i32, i32, i32) {
    %c0_i32 = arith.constant 0 : i32
    %c0_i32_0 = arith.constant 0 : i32
    %c0_i32_1 = arith.constant 0 : i32
    %c0_i32_2 = arith.constant 0 : i32
    return %c0_i32, %c0_i32_0, %c0_i32_1 : i32, i32, i32
  }
  func.func @transform_3(%arg0: i32, %arg1: memref<8xi32, #tpu.memory_space<smem>>) -> (i32, i32, i32) {
    %c0_i32 = arith.constant 0 : i32
    %c0_i32_0 = arith.constant 0 : i32
    %c0_i32_1 = arith.constant 0 : i32
    %c0_i32_2 = arith.constant 0 : i32
    return %c0_i32, %c0_i32_0, %c0_i32_1 : i32, i32, i32
  }
  func.func @transform_4(%arg0: i32, %arg1: memref<8xi32, #tpu.memory_space<smem>>) -> (i32, i32) {
    %c0_i32 = arith.constant 0 : i32
    %c0_i32_0 = arith.constant 0 : i32
    return %c0_i32, %arg0 : i32, i32
  }
}

</mosaic_0001>

<llo_original>
// kernel: _compose_forward.1
$region0: #{_compose_forward.1}
  #allocation0 [shape = 'u32[]', space=smem, size = 0x4, offset = 0x4, fixed_abs, tag = 'smem constant byte address 0x4 - core index']
  #allocation1 [shape = 'u32[72,128]{1,0:T(1,128)}', space=vmem, size = 0x9000, scoped, tag = 'internal scratch']
  #allocation2 [shape = 's32[1]{0}', space=sflag, size = 0x4, scoped, tag = 'scoped memory for _compose_forward.1']
  #allocation3 [shape = 'u8[512]{0}', space=smem, size = 0x200, scoped, tag = 'prefetched SMEM operand 0']
  %s0 = inlined_call_operand.vmem [shape: s32[8], index: 0, kind: input, shape index: {}]
  %s1 = inlined_call_operand.vmem [shape: f32[3,1024], index: 1, kind: input, shape index: {}]
  %s2 = inlined_call_operand.vmem [shape: f32[2,16,3], index: 2, kind: input, shape index: {}]
  %s3 = inlined_call_operand.vmem [shape: f32[2,16,1], index: 3, kind: input, shape index: {}]
  %s4 = inlined_call_operand.vmem [shape: f32[2,3,16], index: 4, kind: input, shape index: {}]
  %s5 = inlined_call_operand.vmem [shape: f32[3,1024], index: 5, kind: output, shape index: {}]
  %s6 = sld [smem:[#allocation0]]
  $region49: #{_compose_forward.1} parent=0
    _
  %s8 = ssub.s32 1, %s6
  %s9 = scalar_select 0, %s8, %s6
  %s11 = sshll.u32 %s0, 4
  %s12 = int_to_ptr.vmem [resolvable:$true] %s11
  %14 = dma.vmem_to_smem %s12, 16, [#allocation3], [#allocation2]
  %16 = dma.done [#allocation2], 16
  %17 = sfence
  loop: start=0, step=1, limit=4
  $region2: #{_compose_forward.1} parent=0 // loop_pre_header
    _
  $region3: #{_compose_forward.1} parent=0 // loop_header
    %s19 = sphi 0, %s23
    %p20 = scmp.ge.s32.totalorder %s19, 4
    %s29 = sphi 0, %s31
    %s32 = sphi 0, %s29
    %s33 = sphi 0, %s32
    %s49 = sphi 0, %s33
    %s53 = sphi 0, %s53
    %s55 = sphi 0, %s53
    %s56 = sphi 0, %s55
    %s70 = sphi 0, %s56
    %s74 = sphi 0, %s74
    %s76 = sphi 0, %s74
    %s77 = sphi 0, %s76
    %s91 = sphi 0, %s77
    %s95 = sphi 0, %s95
    %s97 = sphi 0, %s95
    %s98 = sphi 0, %s97
    %s112 = sphi 0, %s98
    %s118 = sphi 0, %s120
    %s121 = sphi 0, %s118
    %s122 = sphi 0, %s121
    %s138 = sphi 0, %s122
  $region4: #{_compose_forward.1} parent=0 // loop_header_branch
    %22 = sbr.rel (%p20) target = $region8
  $region5: #{_compose_forward.1} parent=0 // loop_body
    %s24 = ssub.s32 %s19, 1
    %s25 = ssub.s32 %s19, 2
    %s26 = sadd.s32 %s19, 1
    %s27 = ssub.s32 %s19, %s26
    %p28 = scmp.eq.s32.totalorder %s27, 0
    %s30 = sadd.s32 %s29, 1
    %s31 = scalar_select %p28, %s29, %s30
    %p34 = pneg %p28
    %p35 = scmp.eq.s32.totalorder %s19, 1
    %p36 = por %p34, %p35
    %p37 = scmp.ne.s32.totalorder %s29, %s32
    %p38 = scmp.eq.s32.totalorder %s19, 0
    %p39 = por %p37, %p38
    %p40 = scmp.ne.s32.totalorder %s29, %s32
    %p41 = scmp.eq.s32.totalorder %s24, 1
    %p42 = por %p40, %p41
    %p43 = scmp.ne.s32.totalorder %s32, %s33
    %p44 = scmp.eq.s32.totalorder %s24, 0
    %p45 = por %p43, %p44
    %p46 = scmp.ne.s32.totalorder %s32, %s33
    %p47 = scmp.eq.s32.totalorder %s25, 1
    %p48 = por %p46, %p47
    %p50 = scmp.ne.s32.totalorder %s33, %s49
    %p51 = scmp.eq.s32.totalorder %s25, 0
    %p52 = por %p50, %p51
    %s54 = sadd.s32 %s53, 1
    %p57 = scmp.eq.s32.totalorder %s19, 1
    %p58 = scmp.ne.s32.totalorder %s53, %s55
    %p59 = scmp.eq.s32.totalorder %s19, 0
    %p60 = por %p58, %p59
    %p61 = scmp.ne.s32.totalorder %s53, %s55
    %p62 = scmp.eq.s32.totalorder %s24, 1
    %p63 = por %p61, %p62
    %p64 = scmp.ne.s32.totalorder %s55, %s56
    %p65 = scmp.eq.s32.totalorder %s24, 0
    %p66 = por %p64, %p65
    %p67 = scmp.ne.s32.totalorder %s55, %s56
    %p68 = scmp.eq.s32.totalorder %s25, 1
    %p69 = por %p67, %p68
    %p71 = scmp.ne.s32.totalorder %s56, %s70
    %p72 = scmp.eq.s32.totalorder %s25, 0
    %p73 = por %p71, %p72
    %s75 = sadd.s32 %s74, 1
    %p78 = scmp.eq.s32.totalorder %s19, 1
    %p79 = scmp.ne.s32.totalorder %s74, %s76
    %p80 = scmp.eq.s32.totalorder %s19, 0
    %p81 = por %p79, %p80
    %p82 = scmp.ne.s32.totalorder %s74, %s76
    %p83 = scmp.eq.s32.totalorder %s24, 1
    %p84 = por %p82, %p83
    %p85 = scmp.ne.s32.totalorder %s76, %s77
    %p86 = scmp.eq.s32.totalorder %s24, 0
    %p87 = por %p85, %p86
    %p88 = scmp.ne.s32.totalorder %s76, %s77
    %p89 = scmp.eq.s32.totalorder %s25, 1
    %p90 = por %p88, %p89
    %p92 = scmp.ne.s32.totalorder %s77, %s91
    %p93 = scmp.eq.s32.totalorder %s25, 0
    %p94 = por %p92, %p93
    %s96 = sadd.s32 %s95, 1
    %p99 = scmp.eq.s32.totalorder %s19, 1
    %p100 = scmp.ne.s32.totalorder %s95, %s97
    %p101 = scmp.eq.s32.totalorder %s19, 0
    %p102 = por %p100, %p101
    %p103 = scmp.ne.s32.totalorder %s95, %s97
    %p104 = scmp.eq.s32.totalorder %s24, 1
    %p105 = por %p103, %p104
    %p106 = scmp.ne.s32.totalorder %s97, %s98
    %p107 = scmp.eq.s32.totalorder %s24, 0
    %p108 = por %p106, %p107
    %p109 = scmp.ne.s32.totalorder %s97, %s98
    %p110 = scmp.eq.s32.totalorder %s25, 1
    %p111 = por %p109, %p110
    %p113 = scmp.ne.s32.totalorder %s98, %s112
    %p114 = scmp.eq.s32.totalorder %s25, 0
    %p115 = por %p113, %p114
    %s116 = ssub.s32 %s19, %s26
    %p117 = scmp.eq.s32.totalorder %s116, 0
    %s119 = sadd.s32 %s118, 1
    %s120 = scalar_select %p117, %s118, %s119
    %p123 = pneg %p117
    %p124 = scmp.eq.s32.totalorder %s19, 1
    %p125 = por %p123, %p124
    %p126 = scmp.ne.s32.totalorder %s118, %s121
    %p127 = scmp.eq.s32.totalorder %s19, 0
    %p128 = por %p126, %p127
    %p129 = scmp.ne.s32.totalorder %s118, %s121
    %p130 = scmp.eq.s32.totalorder %s24, 1
    %p131 = por %p129, %p130
    %p132 = scmp.ne.s32.totalorder %s121, %s122
    %p133 = scmp.eq.s32.totalorder %s24, 0
    %p134 = por %p132, %p133
    %p135 = scmp.ne.s32.totalorder %s121, %s122
    %p136 = scmp.eq.s32.totalorder %s25, 1
    %p137 = por %p135, %p136
    %p139 = scmp.ne.s32.totalorder %s122, %s138
    %p140 = scmp.eq.s32.totalorder %s25, 0
    %p141 = por %p139, %p140
    %p142 = scmp.le.s32.totalorder 1, %s19
    %p143 = scmp.lt.s32.totalorder %s19, 3
    %p144 = pnand %p142, %p143
    %p145 = pneg %p144
    // Predicated region
    $region9: #{_compose_forward.1} parent=5 // pred_check
      _
    $region10: #{_compose_forward.1} parent=5 // pred_check_branch
      %147 = sbr.rel (%p144) target = $region12
    $region11: #{_compose_forward.1} parent=5 // pred_region
      %s148 = ssub.s32 %s19, 1
      // Predicated region
      $region13: #{_compose_forward.1} parent=11 // pred_check
        %p149 = pneg %p66
      $region14: #{_compose_forward.1} parent=11 // pred_check_branch
        %151 = sbr.rel (%p149) target = $region16
      $region15: #{_compose_forward.1} parent=11 // pred_region
        _
      $region16: #{_compose_forward.1} parent=11 // pred_fallthru
        _
      // Predicated region
      $region17: #{_compose_forward.1} parent=11 // pred_check
        %p152 = pneg %p87
      $region18: #{_compose_forward.1} parent=11 // pred_check_branch
        %154 = sbr.rel (%p152) target = $region20
      $region19: #{_compose_forward.1} parent=11 // pred_region
        _
      $region20: #{_compose_forward.1} parent=11 // pred_fallthru
        _
      // Predicated region
      $region21: #{_compose_forward.1} parent=11 // pred_check
        %p155 = pneg %p108
      $region22: #{_compose_forward.1} parent=11 // pred_check_branch
        %157 = sbr.rel (%p155) target = $region24
      $region23: #{_compose_forward.1} parent=11 // pred_region
        _
      $region24: #{_compose_forward.1} parent=11 // pred_fallthru
        _
    $region12: #{_compose_forward.1} parent=5 // pred_fallthru
      _
    %p158 = scmp.lt.s32.totalorder %s19, 2
    // Predicated region
    $region25: #{_compose_forward.1} parent=5 // pred_check
      %p159 = pneg %p158
    $region26: #{_compose_forward.1} parent=5 // pred_check_branch
      %161 = sbr.rel (%p159) target = $region28
    $region27: #{_compose_forward.1} parent=5 // pred_region
      // Predicated region
      $region29: #{_compose_forward.1} parent=27 // pred_check
        %p162 = pneg %p39
      $region30: #{_compose_forward.1} parent=27 // pred_check_branch
        %164 = sbr.rel (%p162) target = $region32
      $region31: #{_compose_forward.1} parent=27 // pred_region
        %s165 = smul.u32 4, %s19
        %p166 = scmp.lt.s32.totalorder %s165, 7
        %s167 = scalar_select %p166, %s165, 7
        %s168 = smul.addr %s167, 4
        %s169 = scalar_lea.vmem %s1, %s168
        %s170 = smul.u32 4, %s19
      $region32: #{_compose_forward.1} parent=27 // pred_fallthru
        _
    $region28: #{_compose_forward.1} parent=5 // pred_fallthru
      _
    %p171 = scmp.le.s32.totalorder 1, %s19
    %p172 = scmp.lt.s32.totalorder %s19, 3
    %p173 = pnand %p171, %p172
    %p174 = pneg %p173
    // Predicated region
    $region33: #{_compose_forward.1} parent=5 // pred_check
      _
    $region34: #{_compose_forward.1} parent=5 // pred_check_branch
      %176 = sbr.rel (%p173) target = $region36
    $region35: #{_compose_forward.1} parent=5 // pred_region
      %s177 = ssub.s32 %s19, 1
      %s178 = smul.u32 4, %s24
      %p179 = scmp.lt.s32.totalorder %s178, 7
      %s180 = scalar_select %p179, %s178, 7
      %s181 = smul.addr %s180, 4
      %s182 = scalar_lea.vmem %s1, %s181
      %p183 = pneg %p45
      %p184 = pneg %p42
      %p185 = pneg %p66
      %p186 = pneg %p63
      %p187 = pneg %p87
      %p188 = pneg %p84
      %p189 = pneg %p108
      %p190 = pneg %p105
      %p191 = pneg %p134
      %p192 = pneg %p131
      %s193 = smul.u32 4, %s24
      %p194 = scmp.lt.s32.totalorder %s193, 7
      %s195 = scalar_select %p194, %s193, 7
      %s196 = smul.addr %s195, 4
      %s197 = scalar_lea.vmem %s5, %s196
      %s198 = smul.u32 4, %s24
      %p199 = scmp.lt.s32.totalorder %s198, 7
      %s200 = scalar_select %p199, %s198, 7
      %s201 = smul.addr %s200, 4
      %s202 = scalar_lea.vmem %s1, %s201
      %s203 = smul.u32 4, %s24
      %s204 = smul.u32 4, %s24
      %p205 = scmp.lt.s32.totalorder %s204, 7
      %s206 = scalar_select %p205, %s204, 7
      %s207 = smul.addr %s206, 4
      %s208 = scalar_lea.vmem %s5, %s207
      %s209 = smul.u32 4, %s24
      %s210 = smul.u32 %s24, 4
      %s211 = sld [smem:[#allocation3 + %s210]]
      %s212 = smul.u32 %s211, 16
      %s213 = scalar_lea.vmem %s2, %s212
      %v214 = vld [vmem:[%s213] sm:$0xff]
      %v215 = vld [vmem:[%s213 + $0x8] sm:$0xff]
      %s216 = scalar_lea.vmem %s3, %s212
      %v217 = vld [vmem:[%s216] sm:$0xff]
      %v218 = vld [vmem:[%s216 + $0x8] sm:$0xff]
      %s219 = smul.u32 %s211, 4
      %s220 = scalar_lea.vmem %s4, %s219
      %v221 = vld [vmem:[%s220] sm:$0x7]
      %v222 = vld [vmem:[%s202] sm:$0x7]
      %vm223 = vcmask 23552
      %v225 = vsel %vm223, %v214, 0
      %v228 = vsel %vm223, %v215, 0
      %vm230 = vcmask 1042432
      %v232 = vsel %vm230, %v222, 0
      %234 = vmatpush.msra.mxu0 0.0
      %235 = vmatpush.msra.mxu0 0.0
      %236 = vmatpush.msra.mxu0 0.0
      %237 = vmatpush.msra.mxu0 0.0
      %238 = vmatpush.msra.mxu0 0.0
      %239 = vmatpush.msra.mxu0 0.0
      %240 = vmatpush.msra.mxu0 0.0
      %241 = vmatpush.msra.mxu0 0.0
      %242 = vmatpush.msra.mxu0 0.0
      %243 = vmatpush.msra.mxu0 0.0
      %244 = vmatpush.msra.mxu0 0.0
      %245 = vmatpush.msra.mxu0 0.0
      %246 = vmatpush.msra.mxu0 0.0
      %247 = vmatpush.msra.mxu0 0.0
      %248 = vmatpush.msra.mxu0 0.0
      %v249 = vand.u32 %v232, 4294901760
      %250 = vmatpush.msra.mxu0 %v249
      %v251 = vand.u32 %v225, 4294901760
      %v252 = vsub.f32 %v225, %v251
      %v253 = vand.u32 %v252, 4294901760
      %v254 = vsub.f32 %v252, %v253
      %v255 = vand.u32 %v254, 4294901760
      %256 = vmatmul.f32.gmra.mxu0 %v255
      %v257 = vpop.f32.mrf.mxu0
      %v258 = vadd.f32 0.0, %v257
      %v259 = vand.u32 %v228, 4294901760
      %v260 = vsub.f32 %v228, %v259
      %v261 = vand.u32 %v260, 4294901760
      %v262 = vsub.f32 %v260, %v261
      %v263 = vand.u32 %v262, 4294901760
      %264 = vmatmul.f32.gmra.mxu0 %v263
      %v265 = vpop.f32.mrf.mxu0
      %v266 = vadd.f32 0.0, %v265
      %267 = vdwg.mxu0
      %268 = vmatpush.msra.mxu0 0.0
      %269 = vmatpush.msra.mxu0 0.0
      %270 = vmatpush.msra.mxu0 0.0
      %271 = vmatpush.msra.mxu0 0.0
      %272 = vmatpush.msra.mxu0 0.0
      %273 = vmatpush.msra.mxu0 0.0
      %274 = vmatpush.msra.mxu0 0.0
      %275 = vmatpush.msra.mxu0 0.0
      %276 = vmatpush.msra.mxu0 0.0
      %277 = vmatpush.msra.mxu0 0.0
      %278 = vmatpush.msra.mxu0 0.0
      %279 = vmatpush.msra.mxu0 0.0
      %280 = vmatpush.msra.mxu0 0.0
      %281 = vmatpush.msra.mxu0 0.0
      %282 = vmatpush.msra.mxu0 0.0
      %v283 = vand.u32 %v232, 4294901760
      %v284 = vsub.f32 %v232, %v283
      %v285 = vand.u32 %v284, 4294901760
      %v286 = vsub.f32 %v284, %v285
      %v287 = vand.u32 %v286, 4294901760
      %288 = vmatpush.msra.mxu0 %v287
      %v289 = vand.u32 %v225, 4294901760
      %290 = vmatmul.f32.gmra.mxu0 %v289
      %v291 = vpop.f32.mrf.mxu0
      %v292 = vadd.f32 %v258, %v291
      %v293 = vand.u32 %v228, 4294901760
      %294 = vmatmul.f32.gmra.mxu0 %v293
      %v295 = vpop.f32.mrf.mxu0
      %v296 = vadd.f32 %v266, %v295
      %297 = vdwg.mxu0
      %298 = vmatpush.msra.mxu0 0.0
      %299 = vmatpush.msra.mxu0 0.0
      %300 = vmatpush.msra.mxu0 0.0
      %301 = vmatpush.msra.mxu0 0.0
      %302 = vmatpush.msra.mxu0 0.0
      %303 = vmatpush.msra.mxu0 0.0
      %304 = vmatpush.msra.mxu0 0.0
      %305 = vmatpush.msra.mxu0 0.0
      %306 = vmatpush.msra.mxu0 0.0
      %307 = vmatpush.msra.mxu0 0.0
      %308 = vmatpush.msra.mxu0 0.0
      %309 = vmatpush.msra.mxu0 0.0
      %310 = vmatpush.msra.mxu0 0.0
      %311 = vmatpush.msra.mxu0 0.0
      %312 = vmatpush.msra.mxu0 0.0
      %v313 = vand.u32 %v232, 4294901760
      %v314 = vsub.f32 %v232, %v313
      %315 = vmatpush.msra.mxu0 %v314
      %v316 = vand.u32 %v225, 4294901760
      %v317 = vsub.f32 %v225, %v316
      %318 = vmatmul.f32.gmra.mxu0 %v317
      %v319 = vpop.f32.mrf.mxu0
      %v320 = vadd.f32 %v292, %v319
      %v321 = vand.u32 %v228, 4294901760
      %v322 = vsub.f32 %v228, %v321
      %323 = vmatmul.f32.gmra.mxu0 %v322
      %v324 = vpop.f32.mrf.mxu0
      %v325 = vadd.f32 %v296, %v324
      %326 = vdwg.mxu0
      %327 = vmatpush.msra.mxu0 0.0
      %328 = vmatpush.msra.mxu0 0.0
      %329 = vmatpush.msra.mxu0 0.0
      %330 = vmatpush.msra.mxu0 0.0
      %331 = vmatpush.msra.mxu0 0.0
      %332 = vmatpush.msra.mxu0 0.0
      %333 = vmatpush.msra.mxu0 0.0
      %334 = vmatpush.msra.mxu0 0.0
      %335 = vmatpush.msra.mxu0 0.0
      %336 = vmatpush.msra.mxu0 0.0
      %337 = vmatpush.msra.mxu0 0.0
      %338 = vmatpush.msra.mxu0 0.0
      %339 = vmatpush.msra.mxu0 0.0
      %340 = vmatpush.msra.mxu0 0.0
      %341 = vmatpush.msra.mxu0 0.0
      %v342 = vand.u32 %v232, 4294901760
      %343 = vmatpush.msra.mxu0 %v342
      %v344 = vand.u32 %v225, 4294901760
      %v345 = vsub.f32 %v225, %v344
      %v346 = vand.u32 %v345, 4294901760
      %347 = vmatmul.f32.gmra.mxu0 %v346
      %v348 = vpop.f32.mrf.mxu0
      %v349 = vadd.f32 %v320, %v348
      %v350 = vand.u32 %v228, 4294901760
      %v351 = vsub.f32 %v228, %v350
      %v352 = vand.u32 %v351, 4294901760
      %353 = vmatmul.f32.gmra.mxu0 %v352
      %v354 = vpop.f32.mrf.mxu0
      %v355 = vadd.f32 %v325, %v354
      %356 = vdwg.mxu0
      %357 = vmatpush.msra.mxu0 0.0
      %358 = vmatpush.msra.mxu0 0.0
      %359 = vmatpush.msra.mxu0 0.0
      %360 = vmatpush.msra.mxu0 0.0
      %361 = vmatpush.msra.mxu0 0.0
      %362 = vmatpush.msra.mxu0 0.0
      %363 = vmatpush.msra.mxu0 0.0
      %364 = vmatpush.msra.mxu0 0.0
      %365 = vmatpush.msra.mxu0 0.0
      %366 = vmatpush.msra.mxu0 0.0
      %367 = vmatpush.msra.mxu0 0.0
      %368 = vmatpush.msra.mxu0 0.0
      %369 = vmatpush.msra.mxu0 0.0
      %370 = vmatpush.msra.mxu0 0.0
      %371 = vmatpush.msra.mxu0 0.0
      %v372 = vand.u32 %v232, 4294901760
      %v373 = vsub.f32 %v232, %v372
      %v374 = vand.u32 %v373, 4294901760
      %375 = vmatpush.msra.mxu0 %v374
      %v376 = vand.u32 %v225, 4294901760
      %377 = vmatmul.f32.gmra.mxu0 %v376
      %v378 = vpop.f32.mrf.mxu0
      %v379 = vadd.f32 %v349, %v378
      %v380 = vand.u32 %v228, 4294901760
      %381 = vmatmul.f32.gmra.mxu0 %v380
      %v382 = vpop.f32.mrf.mxu0
      %v383 = vadd.f32 %v355, %v382
      %384 = vdwg.mxu0
      %385 = vmatpush.msra.mxu0 0.0
      %386 = vmatpush.msra.mxu0 0.0
      %387 = vmatpush.msra.mxu0 0.0
      %388 = vmatpush.msra.mxu0 0.0
      %389 = vmatpush.msra.mxu0 0.0
      %390 = vmatpush.msra.mxu0 0.0
      %391 = vmatpush.msra.mxu0 0.0
      %392 = vmatpush.msra.mxu0 0.0
      %393 = vmatpush.msra.mxu0 0.0
      %394 = vmatpush.msra.mxu0 0.0
      %395 = vmatpush.msra.mxu0 0.0
      %396 = vmatpush.msra.mxu0 0.0
      %397 = vmatpush.msra.mxu0 0.0
      %398 = vmatpush.msra.mxu0 0.0
      %399 = vmatpush.msra.mxu0 0.0
      %v400 = vand.u32 %v232, 4294901760
      %401 = vmatpush.msra.mxu0 %v400
      %v402 = vand.u32 %v225, 4294901760
      %403 = vmatmul.f32.gmra.mxu0 %v402
      %v404 = vpop.f32.mrf.mxu0
      %v405 = vadd.f32 %v379, %v404
      %v406 = vand.u32 %v228, 4294901760
      %407 = vmatmul.f32.gmra.mxu0 %v406
      %v408 = vpop.f32.mrf.mxu0
      %v409 = vadd.f32 %v383, %v408
      %410 = vdwg.mxu0
      %412 = vset.pattern.permute.xlu0 0
      %413 = vperm.xlu0 %412, %v217
      %v414 = vpop.permute.xlu0 %413
      %417 = vset.pattern.permute.xlu0 0
      %418 = vperm.xlu0 %417, %v218
      %v419 = vpop.permute.xlu0 %418
      %v421 = vsub.f32 %v405, %v414
      %v422 = vsub.f32 %v409, %v419
      %v423 = vmul.f32 %v421, 1.442695
      %v424 = vpow.pop %v423
      %v425 = vmul.f32 %v422, 1.442695
      %v426 = vpow.pop %v425
      %vm427 = vcmask 130048
      %v429 = vsel %vm427, %v221, 0
      %431 = vmatpush.msra.mxu0 0.0
      %432 = vmatpush.msra.mxu0 0.0
      %433 = vmatpush.msra.mxu0 0.0
      %434 = vmatpush.msra.mxu0 0.0
      %435 = vmatpush.msra.mxu0 0.0
      %436 = vmatpush.msra.mxu0 0.0
      %437 = vmatpush.msra.mxu0 0.0
      %438 = vmatpush.msra.mxu0 0.0
      %439 = vmatpush.msra.mxu0 0.0
      %440 = vmatpush.msra.mxu0 0.0
      %441 = vmatpush.msra.mxu0 0.0
      %442 = vmatpush.msra.mxu0 0.0
      %443 = vmatpush.msra.mxu0 0.0
      %444 = vmatpush.msra.mxu0 0.0
      %v445 = vand.u32 %v426, 4294901760
      %446 = vmatpush.msra.mxu0 %v445
      %v447 = vand.u32 %v424, 4294901760
      %448 = vmatpush.msra.mxu0 %v447
      %v449 = vand.u32 %v429, 4294901760
      %v450 = vsub.f32 %v429, %v449
      %v451 = vand.u32 %v450, 4294901760
      %v452 = vsub.f32 %v450, %v451
      %v453 = vand.u32 %v452, 4294901760
      %454 = vmatmul.f32.gmra.mxu0 %v453
      %v455 = vpop.f32.mrf.mxu0
      %v456 = vadd.f32 0.0, %v455
      %457 = vdwg.mxu0
      %458 = vmatpush.msra.mxu0 0.0
      %459 = vmatpush.msra.mxu0 0.0
      %460 = vmatpush.msra.mxu0 0.0
      %461 = vmatpush.msra.mxu0 0.0
      %462 = vmatpush.msra.mxu0 0.0
      %463 = vmatpush.msra.mxu0 0.0
      %464 = vmatpush.msra.mxu0 0.0
      %465 = vmatpush.msra.mxu0 0.0
      %466 = vmatpush.msra.mxu0 0.0
      %467 = vmatpush.msra.mxu0 0.0
      %468 = vmatpush.msra.mxu0 0.0
      %469 = vmatpush.msra.mxu0 0.0
      %470 = vmatpush.msra.mxu0 0.0
      %471 = vmatpush.msra.mxu0 0.0
      %v472 = vand.u32 %v426, 4294901760
      %v473 = vsub.f32 %v426, %v472
      %v474 = vand.u32 %v473, 4294901760
      %v475 = vsub.f32 %v473, %v474
      %v476 = vand.u32 %v475, 4294901760
      %477 = vmatpush.msra.mxu0 %v476
      %v478 = vand.u32 %v424, 4294901760
      %v479 = vsub.f32 %v424, %v478
      %v480 = vand.u32 %v479, 4294901760
      %v481 = vsub.f32 %v479, %v480
      %v482 = vand.u32 %v481, 4294901760
      %483 = vmatpush.msra.mxu0 %v482
      %v484 = vand.u32 %v429, 4294901760
      %485 = vmatmul.f32.gmra.mxu0 %v484
      %v486 = vpop.f32.mrf.mxu0
      %v487 = vadd.f32 %v456, %v486
      %488 = vdwg.mxu0
      %489 = vmatpush.msra.mxu0 0.0
      %490 = vmatpush.msra.mxu0 0.0
      %491 = vmatpush.msra.mxu0 0.0
      %492 = vmatpush.msra.mxu0 0.0
      %493 = vmatpush.msra.mxu0 0.0
      %494 = vmatpush.msra.mxu0 0.0
      %495 = vmatpush.msra.mxu0 0.0
      %496 = vmatpush.msra.mxu0 0.0
      %497 = vmatpush.msra.mxu0 0.0
      %498 = vmatpush.msra.mxu0 0.0
      %499 = vmatpush.msra.mxu0 0.0
      %500 = vmatpush.msra.mxu0 0.0
      %501 = vmatpush.msra.mxu0 0.0
      %502 = vmatpush.msra.mxu0 0.0
      %v503 = vand.u32 %v426, 4294901760
      %v504 = vsub.f32 %v426, %v503
      %505 = vmatpush.msra.mxu0 %v504
      %v506 = vand.u32 %v424, 4294901760
      %v507 = vsub.f32 %v424, %v506
      %508 = vmatpush.msra.mxu0 %v507
      %v509 = vand.u32 %v429, 4294901760
      %v510 = vsub.f32 %v429, %v509
      %511 = vmatmul.f32.gmra.mxu0 %v510
      %v512 = vpop.f32.mrf.mxu0
      %v513 = vadd.f32 %v487, %v512
      %514 = vdwg.mxu0
      %515 = vmatpush.msra.mxu0 0.0
      %516 = vmatpush.msra.mxu0 0.0
      %517 = vmatpush.msra.mxu0 0.0
      %518 = vmatpush.msra.mxu0 0.0
      %519 = vmatpush.msra.mxu0 0.0
      %520 = vmatpush.msra.mxu0 0.0
      %521 = vmatpush.msra.mxu0 0.0
      %522 = vmatpush.msra.mxu0 0.0
      %523 = vmatpush.msra.mxu0 0.0
      %524 = vmatpush.msra.mxu0 0.0
      %525 = vmatpush.msra.mxu0 0.0
      %526 = vmatpush.msra.mxu0 0.0
      %527 = vmatpush.msra.mxu0 0.0
      %528 = vmatpush.msra.mxu0 0.0
      %v529 = vand.u32 %v426, 4294901760
      %530 = vmatpush.msra.mxu0 %v529
      %v531 = vand.u32 %v424, 4294901760
      %532 = vmatpush.msra.mxu0 %v531
      %v533 = vand.u32 %v429, 4294901760
      %v534 = vsub.f32 %v429, %v533
      %v535 = vand.u32 %v534, 4294901760
      %536 = vmatmul.f32.gmra.mxu0 %v535
      %v537 = vpop.f32.mrf.mxu0
      %v538 = vadd.f32 %v513, %v537
      %539 = vdwg.mxu0
      %540 = vmatpush.msra.mxu0 0.0
      %541 = vmatpush.msra.mxu0 0.0
      %542 = vmatpush.msra.mxu0 0.0
      %543 = vmatpush.msra.mxu0 0.0
      %544 = vmatpush.msra.mxu0 0.0
      %545 = vmatpush.msra.mxu0 0.0
      %546 = vmatpush.msra.mxu0 0.0
      %547 = vmatpush.msra.mxu0 0.0
      %548 = vmatpush.msra.mxu0 0.0
      %549 = vmatpush.msra.mxu0 0.0
      %550 = vmatpush.msra.mxu0 0.0
      %551 = vmatpush.msra.mxu0 0.0
      %552 = vmatpush.msra.mxu0 0.0
      %553 = vmatpush.msra.mxu0 0.0
      %v554 = vand.u32 %v426, 4294901760
      %v555 = vsub.f32 %v426, %v554
      %v556 = vand.u32 %v555, 4294901760
      %557 = vmatpush.msra.mxu0 %v556
      %v558 = vand.u32 %v424, 4294901760
      %v559 = vsub.f32 %v424, %v558
      %v560 = vand.u32 %v559, 4294901760
      %561 = vmatpush.msra.mxu0 %v560
      %v562 = vand.u32 %v429, 4294901760
      %563 = vmatmul.f32.gmra.mxu0 %v562
      %v564 = vpop.f32.mrf.mxu0
      %v565 = vadd.f32 %v538, %v564
      %566 = vdwg.mxu0
      %567 = vmatpush.msra.mxu0 0.0
      %568 = vmatpush.msra.mxu0 0.0
      %569 = vmatpush.msra.mxu0 0.0
      %570 = vmatpush.msra.mxu0 0.0
      %571 = vmatpush.msra.mxu0 0.0
      %572 = vmatpush.msra.mxu0 0.0
      %573 = vmatpush.msra.mxu0 0.0
      %574 = vmatpush.msra.mxu0 0.0
      %575 = vmatpush.msra.mxu0 0.0
      %576 = vmatpush.msra.mxu0 0.0
      %577 = vmatpush.msra.mxu0 0.0
      %578 = vmatpush.msra.mxu0 0.0
      %579 = vmatpush.msra.mxu0 0.0
      %580 = vmatpush.msra.mxu0 0.0
      %v581 = vand.u32 %v426, 4294901760
      %582 = vmatpush.msra.mxu0 %v581
      %v583 = vand.u32 %v424, 4294901760
      %584 = vmatpush.msra.mxu0 %v583
      %v585 = vand.u32 %v429, 4294901760
      %586 = vmatmul.f32.gmra.mxu0 %v585
      %v587 = vpop.f32.mrf.mxu0
      %v588 = vadd.f32 %v565, %v587
      %589 = vdwg.mxu0
      %590 = vst [vmem:[%s208] sm:$0x7] %v588
      %s591 = sadd.s32 %s210, 1
      %s592 = sld [smem:[#allocation3 + %s591]]
      %s593 = smul.u32 %s592, 16
      %s594 = scalar_lea.vmem %s2, %s593
      %v595 = vld [vmem:[%s594] sm:$0xff]
      %v596 = vld [vmem:[%s594 + $0x8] sm:$0xff]
      %s597 = scalar_lea.vmem %s3, %s593
      %v598 = vld [vmem:[%s597] sm:$0xff]
      %v599 = vld [vmem:[%s597 + $0x8] sm:$0xff]
      %s600 = smul.u32 %s592, 4
      %s601 = scalar_lea.vmem %s4, %s600
      %v602 = vld [vmem:[%s601] sm:$0x7]
      %v603 = vld [vmem:[%s202 + $0x4] sm:$0x7]
      %v605 = vsel %vm223, %v595, 0
      %v608 = vsel %vm223, %v596, 0
      %v611 = vsel %vm230, %v603, 0
      %613 = vmatpush.msra.mxu0 0.0
      %614 = vmatpush.msra.mxu0 0.0
      %615 = vmatpush.msra.mxu0 0.0
      %616 = vmatpush.msra.mxu0 0.0
      %617 = vmatpush.msra.mxu0 0.0
      %618 = vmatpush.msra.mxu0 0.0
      %619 = vmatpush.msra.mxu0 0.0
      %620 = vmatpush.msra.mxu0 0.0
      %621 = vmatpush.msra.mxu0 0.0
      %622 = vmatpush.msra.mxu0 0.0
      %623 = vmatpush.msra.mxu0 0.0
      %624 = vmatpush.msra.mxu0 0.0
      %625 = vmatpush.msra.mxu0 0.0
      %626 = vmatpush.msra.mxu0 0.0
      %627 = vmatpush.msra.mxu0 0.0
      %v628 = vand.u32 %v611, 4294901760
      %629 = vmatpush.msra.mxu0 %v628
      %v630 = vand.u32 %v605, 4294901760
      %v631 = vsub.f32 %v605, %v630
      %v632 = vand.u32 %v631, 4294901760
      %v633 = vsub.f32 %v631, %v632
      %v634 = vand.u32 %v633, 4294901760
      %635 = vmatmul.f32.gmra.mxu0 %v634
      %v636 = vpop.f32.mrf.mxu0
      %v637 = vadd.f32 0.0, %v636
      %v638 = vand.u32 %v608, 4294901760
      %v639 = vsub.f32 %v608, %v638
      %v640 = vand.u32 %v639, 4294901760
      %v641 = vsub.f32 %v639, %v640
      %v642 = vand.u32 %v641, 4294901760
      %643 = vmatmul.f32.gmra.mxu0 %v642
      %v644 = vpop.f32.mrf.mxu0
      %v645 = vadd.f32 0.0, %v644
      %646 = vdwg.mxu0
      %647 = vmatpush.msra.mxu0 0.0
      %648 = vmatpush.msra.mxu0 0.0
      %649 = vmatpush.msra.mxu0 0.0
      %650 = vmatpush.msra.mxu0 0.0
      %651 = vmatpush.msra.mxu0 0.0
      %652 = vmatpush.msra.mxu0 0.0
      %653 = vmatpush.msra.mxu0 0.0
      %654 = vmatpush.msra.mxu0 0.0
      %655 = vmatpush.msra.mxu0 0.0
      %656 = vmatpush.msra.mxu0 0.0
      %657 = vmatpush.msra.mxu0 0.0
      %658 = vmatpush.msra.mxu0 0.0
      %659 = vmatpush.msra.mxu0 0.0
      %660 = vmatpush.msra.mxu0 0.0
      %661 = vmatpush.msra.mxu0 0.0
      %v662 = vand.u32 %v611, 4294901760
      %v663 = vsub.f32 %v611, %v662
      %v664 = vand.u32 %v663, 4294901760
      %v665 = vsub.f32 %v663, %v664
      %v666 = vand.u32 %v665, 4294901760
      %667 = vmatpush.msra.mxu0 %v666
      %v668 = vand.u32 %v605, 4294901760
      %669 = vmatmul.f32.gmra.mxu0 %v668
      %v670 = vpop.f32.mrf.mxu0
      %v671 = vadd.f32 %v637, %v670
      %v672 = vand.u32 %v608, 4294901760
      %673 = vmatmul.f32.gmra.mxu0 %v672
      %v674 = vpop.f32.mrf.mxu0
      %v675 = vadd.f32 %v645, %v674
      %676 = vdwg.mxu0
      %677 = vmatpush.msra.mxu0 0.0
      %678 = vmatpush.msra.mxu0 0.0
      %679 = vmatpush.msra.mxu0 0.0
      %680 = vmatpush.msra.mxu0 0.0
      %681 = vmatpush.msra.mxu0 0.0
      %682 = vmatpush.msra.mxu0 0.0
      %683 = vmatpush.msra.mxu0 0.0
      %684 = vmatpush.msra.mxu0 0.0
      %685 = vmatpush.msra.mxu0 0.0
      %686 = vmatpush.msra.mxu0 0.0
      %687 = vmatpush.msra.mxu0 0.0
      %688 = vmatpush.msra.mxu0 0.0
      %689 = vmatpush.msra.mxu0 0.0
      %690 = vmatpush.msra.mxu0 0.0
      %691 = vmatpush.msra.mxu0 0.0
      %v692 = vand.u32 %v611, 4294901760
      %v693 = vsub.f32 %v611, %v692
      %694 = vmatpush.msra.mxu0 %v693
      %v695 = vand.u32 %v605, 4294901760
      %v696 = vsub.f32 %v605, %v695
      %697 = vmatmul.f32.gmra.mxu0 %v696
      %v698 = vpop.f32.mrf.mxu0
      %v699 = vadd.f32 %v671, %v698
      %v700 = vand.u32 %v608, 4294901760
      %v701 = vsub.f32 %v608, %v700
      %702 = vmatmul.f32.gmra.mxu0 %v701
      %v703 = vpop.f32.mrf.mxu0
      %v704 = vadd.f32 %v675, %v703
      %705 = vdwg.mxu0
      %706 = vmatpush.msra.mxu0 0.0
      %707 = vmatpush.msra.mxu0 0.0
      %708 = vmatpush.msra.mxu0 0.0
      %709 = vmatpush.msra.mxu0 0.0
      %710 = vmatpush.msra.mxu0 0.0
      %711 = vmatpush.msra.mxu0 0.0
      %712 = vmatpush.msra.mxu0 0.0
      %713 = vmatpush.msra.mxu0 0.0
      %714 = vmatpush.msra.mxu0 0.0
      %715 = vmatpush.msra.mxu0 0.0
      %716 = vmatpush.msra.mxu0 0.0
      %717 = vmatpush.msra.mxu0 0.0
      %718 = vmatpush.msra.mxu0 0.0
      %719 = vmatpush.msra.mxu0 0.0
      %720 = vmatpush.msra.mxu0 0.0
      %v721 = vand.u32 %v611, 4294901760
      %722 = vmatpush.msra.mxu0 %v721
      %v723 = vand.u32 %v605, 4294901760
      %v724 = vsub.f32 %v605, %v723
      %v725 = vand.u32 %v724, 4294901760
      %726 = vmatmul.f32.gmra.mxu0 %v725
      %v727 = vpop.f32.mrf.mxu0
      %v728 = vadd.f32 %v699, %v727
      %v729 = vand.u32 %v608, 4294901760
      %v730 = vsub.f32 %v608, %v729
      %v731 = vand.u32 %v730, 4294901760
      %732 = vmatmul.f32.gmra.mxu0 %v731
      %v733 = vpop.f32.mrf.mxu0
      %v734 = vadd.f32 %v704, %v733
      %735 = vdwg.mxu0
      %736 = vmatpush.msra.mxu0 0.0
      %737 = vmatpush.msra.mxu0 0.0
      %738 = vmatpush.msra.mxu0 0.0
      %739 = vmatpush.msra.mxu0 0.0
      %740 = vmatpush.msra.mxu0 0.0
      %741 = vmatpush.msra.mxu0 0.0
      %742 = vmatpush.msra.mxu0 0.0
      %743 = vmatpush.msra.mxu0 0.0
      %744 = vmatpush.msra.mxu0 0.0
      %745 = vmatpush.msra.mxu0 0.0
      %746 = vmatpush.msra.mxu0 0.0
      %747 = vmatpush.msra.mxu0 0.0
      %748 = vmatpush.msra.mxu0 0.0
      %749 = vmatpush.msra.mxu0 0.0
      %750 = vmatpush.msra.mxu0 0.0
      %v751 = vand.u32 %v611, 4294901760
      %v752 = vsub.f32 %v611, %v751
      %v753 = vand.u32 %v752, 4294901760
      %754 = vmatpush.msra.mxu0 %v753
      %v755 = vand.u32 %v605, 4294901760
      %756 = vmatmul.f32.gmra.mxu0 %v755
      %v757 = vpop.f32.mrf.mxu0
      %v758 = vadd.f32 %v728, %v757
      %v759 = vand.u32 %v608, 4294901760
      %760 = vmatmul.f32.gmra.mxu0 %v759
      %v761 = vpop.f32.mrf.mxu0
      %v762 = vadd.f32 %v734, %v761
      %763 = vdwg.mxu0
      %764 = vmatpush.msra.mxu0 0.0
      %765 = vmatpush.msra.mxu0 0.0
      %766 = vmatpush.msra.mxu0 0.0
      %767 = vmatpush.msra.mxu0 0.0
      %768 = vmatpush.msra.mxu0 0.0
      %769 = vmatpush.msra.mxu0 0.0
      %770 = vmatpush.msra.mxu0 0.0
      %771 = vmatpush.msra.mxu0 0.0
      %772 = vmatpush.msra.mxu0 0.0
      %773 = vmatpush.msra.mxu0 0.0
      %774 = vmatpush.msra.mxu0 0.0
      %775 = vmatpush.msra.mxu0 0.0
      %776 = vmatpush.msra.mxu0 0.0
      %777 = vmatpush.msra.mxu0 0.0
      %778 = vmatpush.msra.mxu0 0.0
      %v779 = vand.u32 %v611, 4294901760
      %780 = vmatpush.msra.mxu0 %v779
      %v781 = vand.u32 %v605, 4294901760
      %782 = vmatmul.f32.gmra.mxu0 %v781
      %v783 = vpop.f32.mrf.mxu0
      %v784 = vadd.f32 %v758, %v783
      %v785 = vand.u32 %v608, 4294901760
      %786 = vmatmul.f32.gmra.mxu0 %v785
      %v787 = vpop.f32.mrf.mxu0
      %v788 = vadd.f32 %v762, %v787
      %789 = vdwg.mxu0
      %791 = vset.pattern.permute.xlu0 0
      %792 = vperm.xlu0 %791, %v598
      %v793 = vpop.permute.xlu0 %792
      %796 = vset.pattern.permute.xlu0 0
      %797 = vperm.xlu0 %796, %v599
      %v798 = vpop.permute.xlu0 %797
      %v800 = vsub.f32 %v784, %v793
      %v801 = vsub.f32 %v788, %v798
      %v802 = vmul.f32 %v800, 1.442695
      %v803 = vpow.pop %v802
      %v804 = vmul.f32 %v801, 1.442695
      %v805 = vpow.pop %v804
      %v807 = vsel %vm427, %v602, 0
      %809 = vmatpush.msra.mxu0 0.0
      %810 = vmatpush.msra.mxu0 0.0
      %811 = vmatpush.msra.mxu0 0.0
      %812 = vmatpush.msra.mxu0 0.0
      %813 = vmatpush.msra.mxu0 0.0
      %814 = vmatpush.msra.mxu0 0.0
      %815 = vmatpush.msra.mxu0 0.0
      %816 = vmatpush.msra.mxu0 0.0
      %817 = vmatpush.msra.mxu0 0.0
      %818 = vmatpush.msra.mxu0 0.0
      %819 = vmatpush.msra.mxu0 0.0
      %820 = vmatpush.msra.mxu0 0.0
      %821 = vmatpush.msra.mxu0 0.0
      %822 = vmatpush.msra.mxu0 0.0
      %v823 = vand.u32 %v805, 4294901760
      %824 = vmatpush.msra.mxu0 %v823
      %v825 = vand.u32 %v803, 4294901760
      %826 = vmatpush.msra.mxu0 %v825
      %v827 = vand.u32 %v807, 4294901760
      %v828 = vsub.f32 %v807, %v827
      %v829 = vand.u32 %v828, 4294901760
      %v830 = vsub.f32 %v828, %v829
      %v831 = vand.u32 %v830, 4294901760
      %832 = vmatmul.f32.gmra.mxu0 %v831
      %v833 = vpop.f32.mrf.mxu0
      %v834 = vadd.f32 0.0, %v833
      %835 = vdwg.mxu0
      %836 = vmatpush.msra.mxu0 0.0
      %837 = vmatpush.msra.mxu0 0.0
      %838 = vmatpush.msra.mxu0 0.0
      %839 = vmatpush.msra.mxu0 0.0
      %840 = vmatpush.msra.mxu0 0.0
      %841 = vmatpush.msra.mxu0 0.0
      %842 = vmatpush.msra.mxu0 0.0
      %843 = vmatpush.msra.mxu0 0.0
      %844 = vmatpush.msra.mxu0 0.0
      %845 = vmatpush.msra.mxu0 0.0
      %846 = vmatpush.msra.mxu0 0.0
      %847 = vmatpush.msra.mxu0 0.0
      %848 = vmatpush.msra.mxu0 0.0
      %849 = vmatpush.msra.mxu0 0.0
      %v850 = vand.u32 %v805, 4294901760
      %v851 = vsub.f32 %v805, %v850
      %v852 = vand.u32 %v851, 4294901760
      %v853 = vsub.f32 %v851, %v852
      %v854 = vand.u32 %v853, 4294901760
      %855 = vmatpush.msra.mxu0 %v854
      %v856 = vand.u32 %v803, 4294901760
      %v857 = vsub.f32 %v803, %v856
      %v858 = vand.u32 %v857, 4294901760
      %v859 = vsub.f32 %v857, %v858
      %v860 = vand.u32 %v859, 4294901760
      %861 = vmatpush.msra.mxu0 %v860
      %v862 = vand.u32 %v807, 4294901760
      %863 = vmatmul.f32.gmra.mxu0 %v862
      %v864 = vpop.f32.mrf.mxu0
      %v865 = vadd.f32 %v834, %v864
      %866 = vdwg.mxu0
      %867 = vmatpush.msra.mxu0 0.0
      %868 = vmatpush.msra.mxu0 0.0
      %869 = vmatpush.msra.mxu0 0.0
      %870 = vmatpush.msra.mxu0 0.0
      %871 = vmatpush.msra.mxu0 0.0
      %872 = vmatpush.msra.mxu0 0.0
      %873 = vmatpush.msra.mxu0 0.0
      %874 = vmatpush.msra.mxu0 0.0
      %875 = vmatpush.msra.mxu0 0.0
      %876 = vmatpush.msra.mxu0 0.0
      %877 = vmatpush.msra.mxu0 0.0
      %878 = vmatpush.msra.mxu0 0.0
      %879 = vmatpush.msra.mxu0 0.0
      %880 = vmatpush.msra.mxu0 0.0
      %v881 = vand.u32 %v805, 4294901760
      %v882 = vsub.f32 %v805, %v881
      %883 = vmatpush.msra.mxu0 %v882
      %v884 = vand.u32 %v803, 4294901760
      %v885 = vsub.f32 %v803, %v884
      %886 = vmatpush.msra.mxu0 %v885
      %v887 = vand.u32 %v807, 4294901760
      %v888 = vsub.f32 %v807, %v887
      %889 = vmatmul.f32.gmra.mxu0 %v888
      %v890 = vpop.f32.mrf.mxu0
      %v891 = vadd.f32 %v865, %v890
      %892 = vdwg.mxu0
      %893 = vmatpush.msra.mxu0 0.0
      %894 = vmatpush.msra.mxu0 0.0
      %895 = vmatpush.msra.mxu0 0.0
      %896 = vmatpush.msra.mxu0 0.0
      %897 = vmatpush.msra.mxu0 0.0
      %898 = vmatpush.msra.mxu0 0.0
      %899 = vmatpush.msra.mxu0 0.0
      %900 = vmatpush.msra.mxu0 0.0
      %901 = vmatpush.msra.mxu0 0.0
      %902 = vmatpush.msra.mxu0 0.0
      %903 = vmatpush.msra.mxu0 0.0
      %904 = vmatpush.msra.mxu0 0.0
      %905 = vmatpush.msra.mxu0 0.0
      %906 = vmatpush.msra.mxu0 0.0
      %v907 = vand.u32 %v805, 4294901760
      %908 = vmatpush.msra.mxu0 %v907
      %v909 = vand.u32 %v803, 4294901760
      %910 = vmatpush.msra.mxu0 %v909
      %v911 = vand.u32 %v807, 4294901760
      %v912 = vsub.f32 %v807, %v911
      %v913 = vand.u32 %v912, 4294901760
      %914 = vmatmul.f32.gmra.mxu0 %v913
      %v915 = vpop.f32.mrf.mxu0
      %v916 = vadd.f32 %v891, %v915
      %917 = vdwg.mxu0
      %918 = vmatpush.msra.mxu0 0.0
      %919 = vmatpush.msra.mxu0 0.0
      %920 = vmatpush.msra.mxu0 0.0
      %921 = vmatpush.msra.mxu0 0.0
      %922 = vmatpush.msra.mxu0 0.0
      %923 = vmatpush.msra.mxu0 0.0
      %924 = vmatpush.msra.mxu0 0.0
      %925 = vmatpush.msra.mxu0 0.0
      %926 = vmatpush.msra.mxu0 0.0
      %927 = vmatpush.msra.mxu0 0.0
      %928 = vmatpush.msra.mxu0 0.0
      %929 = vmatpush.msra.mxu0 0.0
      %930 = vmatpush.msra.mxu0 0.0
      %931 = vmatpush.msra.mxu0 0.0
      %v932 = vand.u32 %v805, 4294901760
      %v933 = vsub.f32 %v805, %v932
      %v934 = vand.u32 %v933, 4294901760
      %935 = vmatpush.msra.mxu0 %v934
      %v936 = vand.u32 %v803, 4294901760
      %v937 = vsub.f32 %v803, %v936
      %v938 = vand.u32 %v937, 4294901760
      %939 = vmatpush.msra.mxu0 %v938
      %v940 = vand.u32 %v807, 4294901760
      %941 = vmatmul.f32.gmra.mxu0 %v940
      %v942 = vpop.f32.mrf.mxu0
      %v943 = vadd.f32 %v916, %v942
      %944 = vdwg.mxu0
      %945 = vmatpush.msra.mxu0 0.0
      %946 = vmatpush.msra.mxu0 0.0
      %947 = vmatpush.msra.mxu0 0.0
      %948 = vmatpush.msra.mxu0 0.0
      %949 = vmatpush.msra.mxu0 0.0
      %950 = vmatpush.msra.mxu0 0.0
      %951 = vmatpush.msra.mxu0 0.0
      %952 = vmatpush.msra.mxu0 0.0
      %953 = vmatpush.msra.mxu0 0.0
      %954 = vmatpush.msra.mxu0 0.0
      %955 = vmatpush.msra.mxu0 0.0
      %956 = vmatpush.msra.mxu0 0.0
      %957 = vmatpush.msra.mxu0 0.0
      %958 = vmatpush.msra.mxu0 0.0
      %v959 = vand.u32 %v805, 4294901760
      %960 = vmatpush.msra.mxu0 %v959
      %v961 = vand.u32 %v803, 4294901760
      %962 = vmatpush.msra.mxu0 %v961
      %v963 = vand.u32 %v807, 4294901760
      %964 = vmatmul.f32.gmra.mxu0 %v963
      %v965 = vpop.f32.mrf.mxu0
      %v966 = vadd.f32 %v943, %v965
      %967 = vdwg.mxu0
      %968 = vst [vmem:[%s208 + $0x4] sm:$0x7] %v966
      %s969 = sadd.s32 %s210, 2
      %s970 = sld [smem:[#allocation3 + %s969]]
      %s971 = smul.u32 %s970, 16
      %s972 = scalar_lea.vmem %s2, %s971
      %v973 = vld [vmem:[%s972] sm:$0xff]
      %v974 = vld [vmem:[%s972 + $0x8] sm:$0xff]
      %s975 = scalar_lea.vmem %s3, %s971
      %v976 = vld [vmem:[%s975] sm:$0xff]
      %v977 = vld [vmem:[%s975 + $0x8] sm:$0xff]
      %s978 = smul.u32 %s970, 4
      %s979 = scalar_lea.vmem %s4, %s978
      %v980 = vld [vmem:[%s979] sm:$0x7]
      %v981 = vld [vmem:[%s202 + $0x8] sm:$0x7]
      %v983 = vsel %vm223, %v973, 0
      %v986 = vsel %vm223, %v974, 0
      %v989 = vsel %vm230, %v981, 0
      %991 = vmatpush.msra.mxu0 0.0
      %992 = vmatpush.msra.mxu0 0.0
      %993 = vmatpush.msra.mxu0 0.0
      %994 = vmatpush.msra.mxu0 0.0
      %995 = vmatpush.msra.mxu0 0.0
      %996 = vmatpush.msra.mxu0 0.0
      %997 = vmatpush.msra.mxu0 0.0
      %998 = vmatpush.msra.mxu0 0.0
      %999 = vmatpush.msra.mxu0 0.0
      %1000 = vmatpush.msra.mxu0 0.0
      %1001 = vmatpush.msra.mxu0 0.0
      %1002 = vmatpush.msra.mxu0 0.0
      %1003 = vmatpush.msra.mxu0 0.0
      %1004 = vmatpush.msra.mxu0 0.0
      %1005 = vmatpush.msra.mxu0 0.0
      %v1006 = vand.u32 %v989, 4294901760
      %1007 = vmatpush.msra.mxu0 %v1006
      %v1008 = vand.u32 %v983, 4294901760
      %v1009 = vsub.f32 %v983, %v1008
      %v1010 = vand.u32 %v1009, 4294901760
      %v1011 = vsub.f32 %v1009, %v1010
      %v1012 = vand.u32 %v1011, 4294901760
      %1013 = vmatmul.f32.gmra.mxu0 %v1012
      %v1014 = vpop.f32.mrf.mxu0
      %v1015 = vadd.f32 0.0, %v1014
      %v1016 = vand.u32 %v986, 4294901760
      %v1017 = vsub.f32 %v986, %v1016
      %v1018 = vand.u32 %v1017, 4294901760
      %v1019 = vsub.f32 %v1017, %v1018
      %v1020 = vand.u32 %v1019, 4294901760
      %1021 = vmatmul.f32.gmra.mxu0 %v1020
      %v1022 = vpop.f32.mrf.mxu0
      %v1023 = vadd.f32 0.0, %v1022
      %1024 = vdwg.mxu0
      %1025 = vmatpush.msra.mxu0 0.0
      %1026 = vmatpush.msra.mxu0 0.0
      %1027 = vmatpush.msra.mxu0 0.0
      %1028 = vmatpush.msra.mxu0 0.0
      %1029 = vmatpush.msra.mxu0 0.0
      %1030 = vmatpush.msra.mxu0 0.0
      %1031 = vmatpush.msra.mxu0 0.0
      %1032 = vmatpush.msra.mxu0 0.0
      %1033 = vmatpush.msra.mxu0 0.0
      %1034 = vmatpush.msra.mxu0 0.0
      %1035 = vmatpush.msra.mxu0 0.0
      %1036 = vmatpush.msra.mxu0 0.0
      %1037 = vmatpush.msra.mxu0 0.0
      %1038 = vmatpush.msra.mxu0 0.0
      %1039 = vmatpush.msra.mxu0 0.0
      %v1040 = vand.u32 %v989, 4294901760
      %v1041 = vsub.f32 %v989, %v1040
      %v1042 = vand.u32 %v1041, 4294901760
      %v1043 = vsub.f32 %v1041, %v1042
      %v1044 = vand.u32 %v1043, 4294901760
      %1045 = vmatpush.msra.mxu0 %v1044
      %v1046 = vand.u32 %v983, 4294901760
      %1047 = vmatmul.f32.gmra.mxu0 %v1046
      %v1048 = vpop.f32.mrf.mxu0
      %v1049 = vadd.f32 %v1015, %v1048
      %v1050 = vand.u32 %v986, 4294901760
      %1051 = vmatmul.f32.gmra.mxu0 %v1050
      %v1052 = vpop.f32.mrf.mxu0
      %v1053 = vadd.f32 %v1023, %v1052
      %1054 = vdwg.mxu0
      %1055 = vmatpush.msra.mxu0 0.0
      %1056 = vmatpush.msra.mxu0 0.0
      %1057 = vmatpush.msra.mxu0 0.0
      %1058 = vmatpush.msra.mxu0 0.0
      %1059 = vmatpush.msra.mxu0 0.0
      %1060 = vmatpush.msra.mxu0 0.0
      %1061 = vmatpush.msra.mxu0 0.0
      %1062 = vmatpush.msra.mxu0 0.0
      %1063 = vmatpush.msra.mxu0 0.0
      %1064 = vmatpush.msra.mxu0 0.0
      %1065 = vmatpush.msra.mxu0 0.0
      %1066 = vmatpush.msra.mxu0 0.0
      %1067 = vmatpush.msra.mxu0 0.0
      %1068 = vmatpush.msra.mxu0 0.0
      %1069 = vmatpush.msra.mxu0 0.0
      %v1070 = vand.u32 %v989, 4294901760
      %v1071 = vsub.f32 %v989, %v1070
      %1072 = vmatpush.msra.mxu0 %v1071
      %v1073 = vand.u32 %v983, 4294901760
      %v1074 = vsub.f32 %v983, %v1073
      %1075 = vmatmul.f32.gmra.mxu0 %v1074
      %v1076 = vpop.f32.mrf.mxu0
      %v1077 = vadd.f32 %v1049, %v1076
      %v1078 = vand.u32 %v986, 4294901760
      %v1079 = vsub.f32 %v986, %v1078
      %1080 = vmatmul.f32.gmra.mxu0 %v1079
      %v1081 = vpop.f32.mrf.mxu0
      %v1082 = vadd.f32 %v1053, %v1081
      %1083 = vdwg.mxu0
      %1084 = vmatpush.msra.mxu0 0.0
      %1085 = vmatpush.msra.mxu0 0.0
      %1086 = vmatpush.msra.mxu0 0.0
      %1087 = vmatpush.msra.mxu0 0.0
      %1088 = vmatpush.msra.mxu0 0.0
      %1089 = vmatpush.msra.mxu0 0.0
      %1090 = vmatpush.msra.mxu0 0.0
      %1091 = vmatpush.msra.mxu0 0.0
      %1092 = vmatpush.msra.mxu0 0.0
      %1093 = vmatpush.msra.mxu0 0.0
      %1094 = vmatpush.msra.mxu0 0.0
      %1095 = vmatpush.msra.mxu0 0.0
      %1096 = vmatpush.msra.mxu0 0.0
      %1097 = vmatpush.msra.mxu0 0.0
      %1098 = vmatpush.msra.mxu0 0.0
      %v1099 = vand.u32 %v989, 4294901760
      %1100 = vmatpush.msra.mxu0 %v1099
      %v1101 = vand.u32 %v983, 4294901760
      %v1102 = vsub.f32 %v983, %v1101
      %v1103 = vand.u32 %v1102, 4294901760
      %1104 = vmatmul.f32.gmra.mxu0 %v1103
      %v1105 = vpop.f32.mrf.mxu0
      %v1106 = vadd.f32 %v1077, %v1105
      %v1107 = vand.u32 %v986, 4294901760
      %v1108 = vsub.f32 %v986, %v1107
      %v1109 = vand.u32 %v1108, 4294901760
      %1110 = vmatmul.f32.gmra.mxu0 %v1109
      %v1111 = vpop.f32.mrf.mxu0
      %v1112 = vadd.f32 %v1082, %v1111
      %1113 = vdwg.mxu0
      %1114 = vmatpush.msra.mxu0 0.0
      %1115 = vmatpush.msra.mxu0 0.0
      %1116 = vmatpush.msra.mxu0 0.0
      %1117 = vmatpush.msra.mxu0 0.0
      %1118 = vmatpush.msra.mxu0 0.0
      %1119 = vmatpush.msra.mxu0 0.0
      %1120 = vmatpush.msra.mxu0 0.0
      %1121 = vmatpush.msra.mxu0 0.0
      %1122 = vmatpush.msra.mxu0 0.0
      %1123 = vmatpush.msra.mxu0 0.0
      %1124 = vmatpush.msra.mxu0 0.0
      %1125 = vmatpush.msra.mxu0 0.0
      %1126 = vmatpush.msra.mxu0 0.0
      %1127 = vmatpush.msra.mxu0 0.0
      %1128 = vmatpush.msra.mxu0 0.0
      %v1129 = vand.u32 %v989, 4294901760
      %v1130 = vsub.f32 %v989, %v1129
      %v1131 = vand.u32 %v1130, 4294901760
      %1132 = vmatpush.msra.mxu0 %v1131
      %v1133 = vand.u32 %v983, 4294901760
      %1134 = vmatmul.f32.gmra.mxu0 %v1133
      %v1135 = vpop.f32.mrf.mxu0
      %v1136 = vadd.f32 %v1106, %v1135
      %v1137 = vand.u32 %v986, 4294901760
      %1138 = vmatmul.f32.gmra.mxu0 %v1137
      %v1139 = vpop.f32.mrf.mxu0
      %v1140 = vadd.f32 %v1112, %v1139
      %1141 = vdwg.mxu0
      %1142 = vmatpush.msra.mxu0 0.0
      %1143 = vmatpush.msra.mxu0 0.0
      %1144 = vmatpush.msra.mxu0 0.0
      %1145 = vmatpush.msra.mxu0 0.0
      %1146 = vmatpush.msra.mxu0 0.0
      %1147 = vmatpush.msra.mxu0 0.0
      %1148 = vmatpush.msra.mxu0 0.0
      %1149 = vmatpush.msra.mxu0 0.0
      %1150 = vmatpush.msra.mxu0 0.0
      %1151 = vmatpush.msra.mxu0 0.0
      %1152 = vmatpush.msra.mxu0 0.0
      %1153 = vmatpush.msra.mxu0 0.0
      %1154 = vmatpush.msra.mxu0 0.0
      %1155 = vmatpush.msra.mxu0 0.0
      %1156 = vmatpush.msra.mxu0 0.0
      %v1157 = vand.u32 %v989, 4294901760
      %1158 = vmatpush.msra.mxu0 %v1157
      %v1159 = vand.u32 %v983, 4294901760
      %1160 = vmatmul.f32.gmra.mxu0 %v1159
      %v1161 = vpop.f32.mrf.mxu0
      %v1162 = vadd.f32 %v1136, %v1161
      %v1163 = vand.u32 %v986, 4294901760
      %1164 = vmatmul.f32.gmra.mxu0 %v1163
      %v1165 = vpop.f32.mrf.mxu0
      %v1166 = vadd.f32 %v1140, %v1165
      %1167 = vdwg.mxu0
      %1169 = vset.pattern.permute.xlu0 0
      %1170 = vperm.xlu0 %1169, %v976
      %v1171 = vpop.permute.xlu0 %1170
      %1174 = vset.pattern.permute.xlu0 0
      %1175 = vperm.xlu0 %1174, %v977
      %v1176 = vpop.permute.xlu0 %1175
      %v1178 = vsub.f32 %v1162, %v1171
      %v1179 = vsub.f32 %v1166, %v1176
      %v1180 = vmul.f32 %v1178, 1.442695
      %v1181 = vpow.pop %v1180
      %v1182 = vmul.f32 %v1179, 1.442695
      %v1183 = vpow.pop %v1182
      %v1185 = vsel %vm427, %v980, 0
      %1187 = vmatpush.msra.mxu0 0.0
      %1188 = vmatpush.msra.mxu0 0.0
      %1189 = vmatpush.msra.mxu0 0.0
      %1190 = vmatpush.msra.mxu0 0.0
      %1191 = vmatpush.msra.mxu0 0.0
      %1192 = vmatpush.msra.mxu0 0.0
      %1193 = vmatpush.msra.mxu0 0.0
      %1194 = vmatpush.msra.mxu0 0.0
      %1195 = vmatpush.msra.mxu0 0.0
      %1196 = vmatpush.msra.mxu0 0.0
      %1197 = vmatpush.msra.mxu0 0.0
      %1198 = vmatpush.msra.mxu0 0.0
      %1199 = vmatpush.msra.mxu0 0.0
      %1200 = vmatpush.msra.mxu0 0.0
      %v1201 = vand.u32 %v1183, 4294901760
      %1202 = vmatpush.msra.mxu0 %v1201
      %v1203 = vand.u32 %v1181, 4294901760
      %1204 = vmatpush.msra.mxu0 %v1203
      %v1205 = vand.u32 %v1185, 4294901760
      %v1206 = vsub.f32 %v1185, %v1205
      %v1207 = vand.u32 %v1206, 4294901760
      %v1208 = vsub.f32 %v1206, %v1207
      %v1209 = vand.u32 %v1208, 4294901760
      %1210 = vmatmul.f32.gmra.mxu0 %v1209
      %v1211 = vpop.f32.mrf.mxu0
      %v1212 = vadd.f32 0.0, %v1211
      %1213 = vdwg.mxu0
      %1214 = vmatpush.msra.mxu0 0.0
      %1215 = vmatpush.msra.mxu0 0.0
      %1216 = vmatpush.msra.mxu0 0.0
      %1217 = vmatpush.msra.mxu0 0.0
      %1218 = vmatpush.msra.mxu0 0.0
      %1219 = vmatpush.msra.mxu0 0.0
      %1220 = vmatpush.msra.mxu0 0.0
      %1221 = vmatpush.msra.mxu0 0.0
      %1222 = vmatpush.msra.mxu0 0.0
      %1223 = vmatpush.msra.mxu0 0.0
      %1224 = vmatpush.msra.mxu0 0.0
      %1225 = vmatpush.msra.mxu0 0.0
      %1226 = vmatpush.msra.mxu0 0.0
      %1227 = vmatpush.msra.mxu0 0.0
      %v1228 = vand.u32 %v1183, 4294901760
      %v1229 = vsub.f32 %v1183, %v1228
      %v1230 = vand.u32 %v1229, 4294901760
      %v1231 = vsub.f32 %v1229, %v1230
      %v1232 = vand.u32 %v1231, 4294901760
      %1233 = vmatpush.msra.mxu0 %v1232
      %v1234 = vand.u32 %v1181, 4294901760
      %v1235 = vsub.f32 %v1181, %v1234
      %v1236 = vand.u32 %v1235, 4294901760
      %v1237 = vsub.f32 %v1235, %v1236
      %v1238 = vand.u32 %v1237, 4294901760
      %1239 = vmatpush.msra.mxu0 %v1238
      %v1240 = vand.u32 %v1185, 4294901760
      %1241 = vmatmul.f32.gmra.mxu0 %v1240
      %v1242 = vpop.f32.mrf.mxu0
      %v1243 = vadd.f32 %v1212, %v1242
      %1244 = vdwg.mxu0
      %1245 = vmatpush.msra.mxu0 0.0
      %1246 = vmatpush.msra.mxu0 0.0
      %1247 = vmatpush.msra.mxu0 0.0
      %1248 = vmatpush.msra.mxu0 0.0
      %1249 = vmatpush.msra.mxu0 0.0
      %1250 = vmatpush.msra.mxu0 0.0
      %1251 = vmatpush.msra.mxu0 0.0
      %1252 = vmatpush.msra.mxu0 0.0
      %1253 = vmatpush.msra.mxu0 0.0
      %1254 = vmatpush.msra.mxu0 0.0
      %1255 = vmatpush.msra.mxu0 0.0
      %1256 = vmatpush.msra.mxu0 0.0
      %1257 = vmatpush.msra.mxu0 0.0
      %1258 = vmatpush.msra.mxu0 0.0
      %v1259 = vand.u32 %v1183, 4294901760
      %v1260 = vsub.f32 %v1183, %v1259
      %1261 = vmatpush.msra.mxu0 %v1260
      %v1262 = vand.u32 %v1181, 4294901760
      %v1263 = vsub.f32 %v1181, %v1262
      %1264 = vmatpush.msra.mxu0 %v1263
      %v1265 = vand.u32 %v1185, 4294901760
      %v1266 = vsub.f32 %v1185, %v1265
      %1267 = vmatmul.f32.gmra.mxu0 %v1266
      %v1268 = vpop.f32.mrf.mxu0
      %v1269 = vadd.f32 %v1243, %v1268
      %1270 = vdwg.mxu0
      %1271 = vmatpush.msra.mxu0 0.0
      %1272 = vmatpush.msra.mxu0 0.0
      %1273 = vmatpush.msra.mxu0 0.0
      %1274 = vmatpush.msra.mxu0 0.0
      %1275 = vmatpush.msra.mxu0 0.0
      %1276 = vmatpush.msra.mxu0 0.0
      %1277 = vmatpush.msra.mxu0 0.0
      %1278 = vmatpush.msra.mxu0 0.0
      %1279 = vmatpush.msra.mxu0 0.0
      %1280 = vmatpush.msra.mxu0 0.0
      %1281 = vmatpush.msra.mxu0 0.0
      %1282 = vmatpush.msra.mxu0 0.0
      %1283 = vmatpush.msra.mxu0 0.0
      %1284 = vmatpush.msra.mxu0 0.0
      %v1285 = vand.u32 %v1183, 4294901760
      %1286 = vmatpush.msra.mxu0 %v1285
      %v1287 = vand.u32 %v1181, 4294901760
      %1288 = vmatpush.msra.mxu0 %v1287
      %v1289 = vand.u32 %v1185, 4294901760
      %v1290 = vsub.f32 %v1185, %v1289
      %v1291 = vand.u32 %v1290, 4294901760
      %1292 = vmatmul.f32.gmra.mxu0 %v1291
      %v1293 = vpop.f32.mrf.mxu0
      %v1294 = vadd.f32 %v1269, %v1293
      %1295 = vdwg.mxu0
      %1296 = vmatpush.msra.mxu0 0.0
      %1297 = vmatpush.msra.mxu0 0.0
      %1298 = vmatpush.msra.mxu0 0.0
      %1299 = vmatpush.msra.mxu0 0.0
      %1300 = vmatpush.msra.mxu0 0.0
      %1301 = vmatpush.msra.mxu0 0.0
      %1302 = vmatpush.msra.mxu0 0.0
      %1303 = vmatpush.msra.mxu0 0.0
      %1304 = vmatpush.msra.mxu0 0.0
      %1305 = vmatpush.msra.mxu0 0.0
      %1306 = vmatpush.msra.mxu0 0.0
      %1307 = vmatpush.msra.mxu0 0.0
      %1308 = vmatpush.msra.mxu0 0.0
      %1309 = vmatpush.msra.mxu0 0.0
      %v1310 = vand.u32 %v1183, 4294901760
      %v1311 = vsub.f32 %v1183, %v1310
      %v1312 = vand.u32 %v1311, 4294901760
      %1313 = vmatpush.msra.mxu0 %v1312
      %v1314 = vand.u32 %v1181, 4294901760
      %v1315 = vsub.f32 %v1181, %v1314
      %v1316 = vand.u32 %v1315, 4294901760
      %1317 = vmatpush.msra.mxu0 %v1316
      %v1318 = vand.u32 %v1185, 4294901760
      %1319 = vmatmul.f32.gmra.mxu0 %v1318
      %v1320 = vpop.f32.mrf.mxu0
      %v1321 = vadd.f32 %v1294, %v1320
      %1322 = vdwg.mxu0
      %1323 = vmatpush.msra.mxu0 0.0
      %1324 = vmatpush.msra.mxu0 0.0
      %1325 = vmatpush.msra.mxu0 0.0
      %1326 = vmatpush.msra.mxu0 0.0
      %1327 = vmatpush.msra.mxu0 0.0
      %1328 = vmatpush.msra.mxu0 0.0
      %1329 = vmatpush.msra.mxu0 0.0
      %1330 = vmatpush.msra.mxu0 0.0
      %1331 = vmatpush.msra.mxu0 0.0
      %1332 = vmatpush.msra.mxu0 0.0
      %1333 = vmatpush.msra.mxu0 0.0
      %1334 = vmatpush.msra.mxu0 0.0
      %1335 = vmatpush.msra.mxu0 0.0
      %1336 = vmatpush.msra.mxu0 0.0
      %v1337 = vand.u32 %v1183, 4294901760
      %1338 = vmatpush.msra.mxu0 %v1337
      %v1339 = vand.u32 %v1181, 4294901760
      %1340 = vmatpush.msra.mxu0 %v1339
      %v1341 = vand.u32 %v1185, 4294901760
      %1342 = vmatmul.f32.gmra.mxu0 %v1341
      %v1343 = vpop.f32.mrf.mxu0
      %v1344 = vadd.f32 %v1321, %v1343
      %1345 = vdwg.mxu0
      %1346 = vst [vmem:[%s208 + $0x8] sm:$0x7] %v1344
      %s1347 = sadd.s32 %s210, 3
      %s1348 = sld [smem:[#allocation3 + %s1347]]
      %s1349 = smul.u32 %s1348, 16
      %s1350 = scalar_lea.vmem %s2, %s1349
      %v1351 = vld [vmem:[%s1350] sm:$0xff]
      %v1352 = vld [vmem:[%s1350 + $0x8] sm:$0xff]
      %s1353 = scalar_lea.vmem %s3, %s1349
      %v1354 = vld [vmem:[%s1353] sm:$0xff]
      %v1355 = vld [vmem:[%s1353 + $0x8] sm:$0xff]
      %s1356 = smul.u32 %s1348, 4
      %s1357 = scalar_lea.vmem %s4, %s1356
      %v1358 = vld [vmem:[%s1357] sm:$0x7]
      %v1359 = vld [vmem:[%s202 + $0xc] sm:$0x7]
      %v1361 = vsel %vm223, %v1351, 0
      %v1364 = vsel %vm223, %v1352, 0
      %v1367 = vsel %vm230, %v1359, 0
      %1369 = vmatpush.msra.mxu0 0.0
      %1370 = vmatpush.msra.mxu0 0.0
      %1371 = vmatpush.msra.mxu0 0.0
      %1372 = vmatpush.msra.mxu0 0.0
      %1373 = vmatpush.msra.mxu0 0.0
      %1374 = vmatpush.msra.mxu0 0.0
      %1375 = vmatpush.msra.mxu0 0.0
      %1376 = vmatpush.msra.mxu0 0.0
      %1377 = vmatpush.msra.mxu0 0.0
      %1378 = vmatpush.msra.mxu0 0.0
      %1379 = vmatpush.msra.mxu0 0.0
      %1380 = vmatpush.msra.mxu0 0.0
      %1381 = vmatpush.msra.mxu0 0.0
      %1382 = vmatpush.msra.mxu0 0.0
      %1383 = vmatpush.msra.mxu0 0.0
      %v1384 = vand.u32 %v1367, 4294901760
      %1385 = vmatpush.msra.mxu0 %v1384
      %v1386 = vand.u32 %v1361, 4294901760
      %v1387 = vsub.f32 %v1361, %v1386
      %v1388 = vand.u32 %v1387, 4294901760
      %v1389 = vsub.f32 %v1387, %v1388
      %v1390 = vand.u32 %v1389, 4294901760
      %1391 = vmatmul.f32.gmra.mxu0 %v1390
      %v1392 = vpop.f32.mrf.mxu0
      %v1393 = vadd.f32 0.0, %v1392
      %v1394 = vand.u32 %v1364, 4294901760
      %v1395 = vsub.f32 %v1364, %v1394
      %v1396 = vand.u32 %v1395, 4294901760
      %v1397 = vsub.f32 %v1395, %v1396
      %v1398 = vand.u32 %v1397, 4294901760
      %1399 = vmatmul.f32.gmra.mxu0 %v1398
      %v1400 = vpop.f32.mrf.mxu0
      %v1401 = vadd.f32 0.0, %v1400
      %1402 = vdwg.mxu0
      %1403 = vmatpush.msra.mxu0 0.0
      %1404 = vmatpush.msra.mxu0 0.0
      %1405 = vmatpush.msra.mxu0 0.0
      %1406 = vmatpush.msra.mxu0 0.0
      %1407 = vmatpush.msra.mxu0 0.0
      %1408 = vmatpush.msra.mxu0 0.0
      %1409 = vmatpush.msra.mxu0 0.0
      %1410 = vmatpush.msra.mxu0 0.0
      %1411 = vmatpush.msra.mxu0 0.0
      %1412 = vmatpush.msra.mxu0 0.0
      %1413 = vmatpush.msra.mxu0 0.0
      %1414 = vmatpush.msra.mxu0 0.0
      %1415 = vmatpush.msra.mxu0 0.0
      %1416 = vmatpush.msra.mxu0 0.0
      %1417 = vmatpush.msra.mxu0 0.0
      %v1418 = vand.u32 %v1367, 4294901760
      %v1419 = vsub.f32 %v1367, %v1418
      %v1420 = vand.u32 %v1419, 4294901760
      %v1421 = vsub.f32 %v1419, %v1420
      %v1422 = vand.u32 %v1421, 4294901760
      %1423 = vmatpush.msra.mxu0 %v1422
      %v1424 = vand.u32 %v1361, 4294901760
      %1425 = vmatmul.f32.gmra.mxu0 %v1424
      %v1426 = vpop.f32.mrf.mxu0
      %v1427 = vadd.f32 %v1393, %v1426
      %v1428 = vand.u32 %v1364, 4294901760
      %1429 = vmatmul.f32.gmra.mxu0 %v1428
      %v1430 = vpop.f32.mrf.mxu0
      %v1431 = vadd.f32 %v1401, %v1430
      %1432 = vdwg.mxu0
      %1433 = vmatpush.msra.mxu0 0.0
      %1434 = vmatpush.msra.mxu0 0.0
      %1435 = vmatpush.msra.mxu0 0.0
      %1436 = vmatpush.msra.mxu0 0.0
      %1437 = vmatpush.msra.mxu0 0.0
      %1438 = vmatpush.msra.mxu0 0.0
      %1439 = vmatpush.msra.mxu0 0.0
      %1440 = vmatpush.msra.mxu0 0.0
      %1441 = vmatpush.msra.mxu0 0.0
      %1442 = vmatpush.msra.mxu0 0.0
      %1443 = vmatpush.msra.mxu0 0.0
      %1444 = vmatpush.msra.mxu0 0.0
      %1445 = vmatpush.msra.mxu0 0.0
      %1446 = vmatpush.msra.mxu0 0.0
      %1447 = vmatpush.msra.mxu0 0.0
      %v1448 = vand.u32 %v1367, 4294901760
      %v1449 = vsub.f32 %v1367, %v1448
      %1450 = vmatpush.msra.mxu0 %v1449
      %v1451 = vand.u32 %v1361, 4294901760
      %v1452 = vsub.f32 %v1361, %v1451
      %1453 = vmatmul.f32.gmra.mxu0 %v1452
      %v1454 = vpop.f32.mrf.mxu0
      %v1455 = vadd.f32 %v1427, %v1454
      %v1456 = vand.u32 %v1364, 4294901760
      %v1457 = vsub.f32 %v1364, %v1456
      %1458 = vmatmul.f32.gmra.mxu0 %v1457
      %v1459 = vpop.f32.mrf.mxu0
      %v1460 = vadd.f32 %v1431, %v1459
      %1461 = vdwg.mxu0
      %1462 = vmatpush.msra.mxu0 0.0
      %1463 = vmatpush.msra.mxu0 0.0
      %1464 = vmatpush.msra.mxu0 0.0
      %1465 = vmatpush.msra.mxu0 0.0
      %1466 = vmatpush.msra.mxu0 0.0
      %1467 = vmatpush.msra.mxu0 0.0
      %1468 = vmatpush.msra.mxu0 0.0
      %1469 = vmatpush.msra.mxu0 0.0
      %1470 = vmatpush.msra.mxu0 0.0
      %1471 = vmatpush.msra.mxu0 0.0
      %1472 = vmatpush.msra.mxu0 0.0
      %1473 = vmatpush.msra.mxu0 0.0
      %1474 = vmatpush.msra.mxu0 0.0
      %1475 = vmatpush.msra.mxu0 0.0
      %1476 = vmatpush.msra.mxu0 0.0
      %v1477 = vand.u32 %v1367, 4294901760
      %1478 = vmatpush.msra.mxu0 %v1477
      %v1479 = vand.u32 %v1361, 4294901760
      %v1480 = vsub.f32 %v1361, %v1479
      %v1481 = vand.u32 %v1480, 4294901760
      %1482 = vmatmul.f32.gmra.mxu0 %v1481
      %v1483 = vpop.f32.mrf.mxu0
      %v1484 = vadd.f32 %v1455, %v1483
      %v1485 = vand.u32 %v1364, 4294901760
      %v1486 = vsub.f32 %v1364, %v1485
      %v1487 = vand.u32 %v1486, 4294901760
      %1488 = vmatmul.f32.gmra.mxu0 %v1487
      %v1489 = vpop.f32.mrf.mxu0
      %v1490 = vadd.f32 %v1460, %v1489
      %1491 = vdwg.mxu0
      %1492 = vmatpush.msra.mxu0 0.0
      %1493 = vmatpush.msra.mxu0 0.0
      %1494 = vmatpush.msra.mxu0 0.0
      %1495 = vmatpush.msra.mxu0 0.0
      %1496 = vmatpush.msra.mxu0 0.0
      %1497 = vmatpush.msra.mxu0 0.0
      %1498 = vmatpush.msra.mxu0 0.0
      %1499 = vmatpush.msra.mxu0 0.0
      %1500 = vmatpush.msra.mxu0 0.0
      %1501 = vmatpush.msra.mxu0 0.0
      %1502 = vmatpush.msra.mxu0 0.0
      %1503 = vmatpush.msra.mxu0 0.0
      %1504 = vmatpush.msra.mxu0 0.0
      %1505 = vmatpush.msra.mxu0 0.0
      %1506 = vmatpush.msra.mxu0 0.0
      %v1507 = vand.u32 %v1367, 4294901760
      %v1508 = vsub.f32 %v1367, %v1507
      %v1509 = vand.u32 %v1508, 4294901760
      %1510 = vmatpush.msra.mxu0 %v1509
      %v1511 = vand.u32 %v1361, 4294901760
      %1512 = vmatmul.f32.gmra.mxu0 %v1511
      %v1513 = vpop.f32.mrf.mxu0
      %v1514 = vadd.f32 %v1484, %v1513
      %v1515 = vand.u32 %v1364, 4294901760
      %1516 = vmatmul.f32.gmra.mxu0 %v1515
      %v1517 = vpop.f32.mrf.mxu0
      %v1518 = vadd.f32 %v1490, %v1517
      %1519 = vdwg.mxu0
      %1520 = vmatpush.msra.mxu0 0.0
      %1521 = vmatpush.msra.mxu0 0.0
      %1522 = vmatpush.msra.mxu0 0.0
      %1523 = vmatpush.msra.mxu0 0.0
      %1524 = vmatpush.msra.mxu0 0.0
      %1525 = vmatpush.msra.mxu0 0.0
      %1526 = vmatpush.msra.mxu0 0.0
      %1527 = vmatpush.msra.mxu0 0.0
      %1528 = vmatpush.msra.mxu0 0.0
      %1529 = vmatpush.msra.mxu0 0.0
      %1530 = vmatpush.msra.mxu0 0.0
      %1531 = vmatpush.msra.mxu0 0.0
      %1532 = vmatpush.msra.mxu0 0.0
      %1533 = vmatpush.msra.mxu0 0.0
      %1534 = vmatpush.msra.mxu0 0.0
      %v1535 = vand.u32 %v1367, 4294901760
      %1536 = vmatpush.msra.mxu0 %v1535
      %v1537 = vand.u32 %v1361, 4294901760
      %1538 = vmatmul.f32.gmra.mxu0 %v1537
      %v1539 = vpop.f32.mrf.mxu0
      %v1540 = vadd.f32 %v1514, %v1539
      %v1541 = vand.u32 %v1364, 4294901760
      %1542 = vmatmul.f32.gmra.mxu0 %v1541
      %v1543 = vpop.f32.mrf.mxu0
      %v1544 = vadd.f32 %v1518, %v1543
      %1545 = vdwg.mxu0
      %1547 = vset.pattern.permute.xlu0 0
      %1548 = vperm.xlu0 %1547, %v1354
      %v1549 = vpop.permute.xlu0 %1548
      %1552 = vset.pattern.permute.xlu0 0
      %1553 = vperm.xlu0 %1552, %v1355
      %v1554 = vpop.permute.xlu0 %1553
      %v1556 = vsub.f32 %v1540, %v1549
      %v1557 = vsub.f32 %v1544, %v1554
      %v1558 = vmul.f32 %v1556, 1.442695
      %v1559 = vpow.pop %v1558
      %v1560 = vmul.f32 %v1557, 1.442695
      %v1561 = vpow.pop %v1560
      %v1563 = vsel %vm427, %v1358, 0
      %1565 = vmatpush.msra.mxu0 0.0
      %1566 = vmatpush.msra.mxu0 0.0
      %1567 = vmatpush.msra.mxu0 0.0
      %1568 = vmatpush.msra.mxu0 0.0
      %1569 = vmatpush.msra.mxu0 0.0
      %1570 = vmatpush.msra.mxu0 0.0
      %1571 = vmatpush.msra.mxu0 0.0
      %1572 = vmatpush.msra.mxu0 0.0
      %1573 = vmatpush.msra.mxu0 0.0
      %1574 = vmatpush.msra.mxu0 0.0
      %1575 = vmatpush.msra.mxu0 0.0
      %1576 = vmatpush.msra.mxu0 0.0
      %1577 = vmatpush.msra.mxu0 0.0
      %1578 = vmatpush.msra.mxu0 0.0
      %v1579 = vand.u32 %v1561, 4294901760
      %1580 = vmatpush.msra.mxu0 %v1579
      %v1581 = vand.u32 %v1559, 4294901760
      %1582 = vmatpush.msra.mxu0 %v1581
      %v1583 = vand.u32 %v1563, 4294901760
      %v1584 = vsub.f32 %v1563, %v1583
      %v1585 = vand.u32 %v1584, 4294901760
      %v1586 = vsub.f32 %v1584, %v1585
      %v1587 = vand.u32 %v1586, 4294901760
      %1588 = vmatmul.f32.gmra.mxu0 %v1587
      %v1589 = vpop.f32.mrf.mxu0
      %v1590 = vadd.f32 0.0, %v1589
      %1591 = vdwg.mxu0
      %1592 = vmatpush.msra.mxu0 0.0
      %1593 = vmatpush.msra.mxu0 0.0
      %1594 = vmatpush.msra.mxu0 0.0
      %1595 = vmatpush.msra.mxu0 0.0
      %1596 = vmatpush.msra.mxu0 0.0
      %1597 = vmatpush.msra.mxu0 0.0
      %1598 = vmatpush.msra.mxu0 0.0
      %1599 = vmatpush.msra.mxu0 0.0
      %1600 = vmatpush.msra.mxu0 0.0
      %1601 = vmatpush.msra.mxu0 0.0
      %1602 = vmatpush.msra.mxu0 0.0
      %1603 = vmatpush.msra.mxu0 0.0
      %1604 = vmatpush.msra.mxu0 0.0
      %1605 = vmatpush.msra.mxu0 0.0
      %v1606 = vand.u32 %v1561, 4294901760
      %v1607 = vsub.f32 %v1561, %v1606
      %v1608 = vand.u32 %v1607, 4294901760
      %v1609 = vsub.f32 %v1607, %v1608
      %v1610 = vand.u32 %v1609, 4294901760
      %1611 = vmatpush.msra.mxu0 %v1610
      %v1612 = vand.u32 %v1559, 4294901760
      %v1613 = vsub.f32 %v1559, %v1612
      %v1614 = vand.u32 %v1613, 4294901760
      %v1615 = vsub.f32 %v1613, %v1614
      %v1616 = vand.u32 %v1615, 4294901760
      %1617 = vmatpush.msra.mxu0 %v1616
      %v1618 = vand.u32 %v1563, 4294901760
      %1619 = vmatmul.f32.gmra.mxu0 %v1618
      %v1620 = vpop.f32.mrf.mxu0
      %v1621 = vadd.f32 %v1590, %v1620
      %1622 = vdwg.mxu0
      %1623 = vmatpush.msra.mxu0 0.0
      %1624 = vmatpush.msra.mxu0 0.0
      %1625 = vmatpush.msra.mxu0 0.0
      %1626 = vmatpush.msra.mxu0 0.0
      %1627 = vmatpush.msra.mxu0 0.0
      %1628 = vmatpush.msra.mxu0 0.0
      %1629 = vmatpush.msra.mxu0 0.0
      %1630 = vmatpush.msra.mxu0 0.0
      %1631 = vmatpush.msra.mxu0 0.0
      %1632 = vmatpush.msra.mxu0 0.0
      %1633 = vmatpush.msra.mxu0 0.0
      %1634 = vmatpush.msra.mxu0 0.0
      %1635 = vmatpush.msra.mxu0 0.0
      %1636 = vmatpush.msra.mxu0 0.0
      %v1637 = vand.u32 %v1561, 4294901760
      %v1638 = vsub.f32 %v1561, %v1637
      %1639 = vmatpush.msra.mxu0 %v1638
      %v1640 = vand.u32 %v1559, 4294901760
      %v1641 = vsub.f32 %v1559, %v1640
      %1642 = vmatpush.msra.mxu0 %v1641
      %v1643 = vand.u32 %v1563, 4294901760
      %v1644 = vsub.f32 %v1563, %v1643
      %1645 = vmatmul.f32.gmra.mxu0 %v1644
      %v1646 = vpop.f32.mrf.mxu0
      %v1647 = vadd.f32 %v1621, %v1646
      %1648 = vdwg.mxu0
      %1649 = vmatpush.msra.mxu0 0.0
      %1650 = vmatpush.msra.mxu0 0.0
      %1651 = vmatpush.msra.mxu0 0.0
      %1652 = vmatpush.msra.mxu0 0.0
      %1653 = vmatpush.msra.mxu0 0.0
      %1654 = vmatpush.msra.mxu0 0.0
      %1655 = vmatpush.msra.mxu0 0.0
      %1656 = vmatpush.msra.mxu0 0.0
      %1657 = vmatpush.msra.mxu0 0.0
      %1658 = vmatpush.msra.mxu0 0.0
      %1659 = vmatpush.msra.mxu0 0.0
      %1660 = vmatpush.msra.mxu0 0.0
      %1661 = vmatpush.msra.mxu0 0.0
      %1662 = vmatpush.msra.mxu0 0.0
      %v1663 = vand.u32 %v1561, 4294901760
      %1664 = vmatpush.msra.mxu0 %v1663
      %v1665 = vand.u32 %v1559, 4294901760
      %1666 = vmatpush.msra.mxu0 %v1665
      %v1667 = vand.u32 %v1563, 4294901760
      %v1668 = vsub.f32 %v1563, %v1667
      %v1669 = vand.u32 %v1668, 4294901760
      %1670 = vmatmul.f32.gmra.mxu0 %v1669
      %v1671 = vpop.f32.mrf.mxu0
      %v1672 = vadd.f32 %v1647, %v1671
      %1673 = vdwg.mxu0
      %1674 = vmatpush.msra.mxu0 0.0
      %1675 = vmatpush.msra.mxu0 0.0
      %1676 = vmatpush.msra.mxu0 0.0
      %1677 = vmatpush.msra.mxu0 0.0
      %1678 = vmatpush.msra.mxu0 0.0
      %1679 = vmatpush.msra.mxu0 0.0
      %1680 = vmatpush.msra.mxu0 0.0
      %1681 = vmatpush.msra.mxu0 0.0
      %1682 = vmatpush.msra.mxu0 0.0
      %1683 = vmatpush.msra.mxu0 0.0
      %1684 = vmatpush.msra.mxu0 0.0
      %1685 = vmatpush.msra.mxu0 0.0
      %1686 = vmatpush.msra.mxu0 0.0
      %1687 = vmatpush.msra.mxu0 0.0
      %v1688 = vand.u32 %v1561, 4294901760
      %v1689 = vsub.f32 %v1561, %v1688
      %v1690 = vand.u32 %v1689, 4294901760
      %1691 = vmatpush.msra.mxu0 %v1690
      %v1692 = vand.u32 %v1559, 4294901760
      %v1693 = vsub.f32 %v1559, %v1692
      %v1694 = vand.u32 %v1693, 4294901760
      %1695 = vmatpush.msra.mxu0 %v1694
      %v1696 = vand.u32 %v1563, 4294901760
      %1697 = vmatmul.f32.gmra.mxu0 %v1696
      %v1698 = vpop.f32.mrf.mxu0
      %v1699 = vadd.f32 %v1672, %v1698
      %1700 = vdwg.mxu0
      %1701 = vmatpush.msra.mxu0 0.0
      %1702 = vmatpush.msra.mxu0 0.0
      %1703 = vmatpush.msra.mxu0 0.0
      %1704 = vmatpush.msra.mxu0 0.0
      %1705 = vmatpush.msra.mxu0 0.0
      %1706 = vmatpush.msra.mxu0 0.0
      %1707 = vmatpush.msra.mxu0 0.0
      %1708 = vmatpush.msra.mxu0 0.0
      %1709 = vmatpush.msra.mxu0 0.0
      %1710 = vmatpush.msra.mxu0 0.0
      %1711 = vmatpush.msra.mxu0 0.0
      %1712 = vmatpush.msra.mxu0 0.0
      %1713 = vmatpush.msra.mxu0 0.0
      %1714 = vmatpush.msra.mxu0 0.0
      %v1715 = vand.u32 %v1561, 4294901760
      %1716 = vmatpush.msra.mxu0 %v1715
      %v1717 = vand.u32 %v1559, 4294901760
      %1718 = vmatpush.msra.mxu0 %v1717
      %v1719 = vand.u32 %v1563, 4294901760
      %1720 = vmatmul.f32.gmra.mxu0 %v1719
      %v1721 = vpop.f32.mrf.mxu0
      %v1722 = vadd.f32 %v1699, %v1721
      %1723 = vdwg.mxu0
      %1724 = vst [vmem:[%s208 + $0xc] sm:$0x7] %v1722
      %s1725 = smul.u32 4, %s24
      %p1726 = scmp.lt.s32.totalorder %s1725, 7
      %s1727 = scalar_select %p1726, %s1725, 7
      %s1728 = smul.addr %s1727, 4
      %s1729 = scalar_lea.vmem %s5, %s1728
      // Predicated region
      $region37: #{_compose_forward.1} parent=35 // pred_check
        %p1730 = pneg %p131
      $region38: #{_compose_forward.1} parent=35 // pred_check_branch
        %1732 = sbr.rel (%p1730) target = $region40
      $region39: #{_compose_forward.1} parent=35 // pred_region
        %s1733 = smul.u32 4, %s24
      $region40: #{_compose_forward.1} parent=35 // pred_fallthru
        _
    $region36: #{_compose_forward.1} parent=5 // pred_fallthru
      _
    %p1734 = scmp.le.s32.totalorder 2, %s19
    // Predicated region
    $region41: #{_compose_forward.1} parent=5 // pred_check
      %p1735 = pneg %p1734
    $region42: #{_compose_forward.1} parent=5 // pred_check_branch
      %1737 = sbr.rel (%p1735) target = $region44
    $region43: #{_compose_forward.1} parent=5 // pred_region
      %s1738 = ssub.s32 %s19, 2
      // Predicated region
      $region45: #{_compose_forward.1} parent=43 // pred_check
        %p1739 = pneg %p137
      $region46: #{_compose_forward.1} parent=43 // pred_check_branch
        %1741 = sbr.rel (%p1739) target = $region48
      $region47: #{_compose_forward.1} parent=43 // pred_region
        %s1742 = smul.u32 4, %s25
        %p1743 = scmp.lt.s32.totalorder %s1742, 7
        %s1744 = scalar_select %p1743, %s1742, 7
        %s1745 = smul.addr %s1744, 4
        %s1746 = scalar_lea.vmem %s5, %s1745
      $region48: #{_compose_forward.1} parent=43 // pred_fallthru
        _
    $region44: #{_compose_forward.1} parent=5 // pred_fallthru
      _
  $region6: #{_compose_forward.1} parent=0 // loop_footer
    %s23 = sadd.s32 1, %s19
  $region7: #{_compose_forward.1} parent=0 // loop_footer_branch
    %18 = sbr.rel target = $region3
  $region8: #{_compose_forward.1} parent=0 // loop_exit
    _

</llo_original>
